<compile_context>
chip_gen: v5e
topology: v5e:2x2
jax: 0.10.0
libtpu: 0.0.40
codegen_flags: <defaults>
</compile_context>

<pallas_src>
import functools

import jax
import jax.numpy as jnp
import numpy as np
from jax.experimental import pallas as pl
from jax.experimental.pallas import tpu as pltpu


def matchnet_kernel(seq_len_ref,              # scalar prefetch: [B] int32 (SMEM)
                    p_ref, q_ref,             # [BB,TP,Hp], [BB,Q,Hp]   (bf16)
                    wt_t_ref, bt_ref,         # [Hp,Hp] (pre-transposed), [1,Hp]
                    wm1_t_ref, wm2_t_ref,     # [Hp,2Hp] pre-transposed splits
                    bm_ref,                   # [1,2Hp]
                    out_ref,                  # [BB,TP,2Hp] (out dtype)
                    transq_ref):              # VMEM scratch [BB,Q,Hp] (bf16)
    bb, tp, hp = p_ref.shape
    _, q_len, _ = q_ref.shape
    h2p = out_ref.shape[-1]
    base = pl.program_id(0) * bb

    # ---- trans_linear: once per batch block, cached across P tiles.
    #      Collapse (BB,Q) -> BB*Q rows to fill the MXU M dim. ----
    @pl.when(pl.program_id(1) == 0)
    def _():
        q2 = q_ref[...].reshape(bb * q_len, hp)
        tq = (jnp.dot(q2, wt_t_ref[...], preferred_element_type=jnp.float32)
              + bt_ref[...])                                   # (BB*Q, Hp) f32
        transq_ref[...] = tq.reshape(bb, q_len, hp).astype(transq_ref.dtype)

    p3 = p_ref[...]                                            # (BB,TP,Hp)
    q3 = q_ref[...]                                            # (BB,Q,Hp)
    trans_q = transq_ref[...]                                  # (BB,Q,Hp) bf16

    # ---- attention scores: p @ trans_q^T, last-dim contraction (no .T) ----
    scores = jnp.einsum("bph,bqh->bpq", p3, trans_q,
                        preferred_element_type=jnp.float32)    # (BB,TP,Q) f32

    # ---- boolean length mask: BB tiny selects + one full-tile compare ----
    b_small = jax.lax.broadcasted_iota(jnp.int32, (bb, 1, 1), 0)
    sl_vec = jnp.zeros((bb, 1, 1), jnp.int32)
    for i in range(bb):                        # static unroll on (bb,1,1) only
        sl_vec = jnp.where(b_small == i, seq_len_ref[base + i], sl_vec)
    col = jax.lax.broadcasted_iota(jnp.int32, (bb, tp, q_len), 2)
    mask = col < sl_vec                                        # bool (BB,TP,Q)

    # ---- masked softmax, reference semantics: softmax(scores*mask), re-mask,
    #      renormalize (+1e-13); fused into a single reciprocal on the EUP.
    #      softmax(v)*mask / (sum(softmax(v)*mask)+1e-13)
    #        == e*mask / (sum(e*mask) + 1e-13*sum(e)) ----
    v = jnp.where(mask, scores, 0.0)
    m = jnp.max(v, axis=-1, keepdims=True)
    e = jnp.exp(v - m)
    sum_all = jnp.sum(e, axis=-1, keepdims=True)
    e_m = jnp.where(mask, e, 0.0)
    sum_msk = jnp.sum(e_m, axis=-1, keepdims=True)
    att_norm = e_m * pl.reciprocal(sum_msk + 1e-13 * sum_all, approx=True)

    # ---- attention-weighted sum over Q ----
    att_vec = jnp.einsum("bpq,bqh->bph", att_norm.astype(q3.dtype), q3,
                         preferred_element_type=jnp.float32)   # (BB,TP,Hp) f32

    # ---- elementwise features in f32 (v5e has no bf16 VPU) ----
    p_f32 = p3.astype(jnp.float32)
    elem_min = att_vec - p_f32
    elem_mul = att_vec * p_f32

    # ---- map_linear on concat([elem_min, elem_mul], -1), split along the
    #      input dim; collapse (BB,TP) -> BB*TP rows for the MXU ----
    em2 = elem_min.reshape(bb * tp, hp).astype(wm1_t_ref.dtype)
    ep2 = elem_mul.reshape(bb * tp, hp).astype(wm2_t_ref.dtype)
    out = (jnp.dot(em2, wm1_t_ref[...], preferred_element_type=jnp.float32)
           + jnp.dot(ep2, wm2_t_ref[...], preferred_element_type=jnp.float32)
           + bm_ref[...])
    out_ref[...] = jnp.maximum(out, 0.0).reshape(bb, tp, h2p).astype(out_ref.dtype)


def _physical_vmem_bytes():
    try:
        info = pltpu.get_tpu_info()
        return int(getattr(info, "vmem_capacity_bytes", 128 * 1024 * 1024))
    except Exception:
        return 128 * 1024 * 1024


def _step_vmem_bytes(bb, tp, q, hp, h2p, out_bytes):
    """Rough per-grid-step live-set estimate (double-buffered I/O + temporaries)."""
    io = 2 * (bb * tp * hp * 2          # proj_p block (bf16)
              + bb * q * hp * 2         # proj_q block (bf16)
              + bb * tp * h2p * out_bytes)
    scratch = bb * q * hp * 2           # trans_q cache
    tmp = 4 * bb * tp * q * 4 + 3 * bb * tp * hp * 4   # softmax + elem f32 temps
    return io + scratch + tmp


def _weight_vmem_bytes(hp, h2p):
    return hp * hp * 2 + 2 * hp * h2p * 2 + (hp + h2p) * 4


def _choose_blocks(b, p, q, hp, h2p, out_bytes, budget):
    divs = lambda n: [d for d in range(1, n + 1) if n % d == 0]
    tp_cands = sorted({d for d in divs(p) if d == p or d % 8 == 0}, reverse=True)
    bb_all = sorted(divs(b), reverse=True)
    # Prefer >= 2 grid steps on the batch axis so the "parallel" axis can be
    # sharded across TensorCores (v7x megacore); cheap on single-TC v5e/v6e.
    bb_pref = [d for d in bb_all if b // d >= 2] or bb_all
    tp_try = [t for t in tp_cands if t <= 512] or [min(tp_cands)]
    for tp in tp_try:                       # biggest P tile that fits ...
        for bb in bb_pref:                  # ... with the biggest batch block
            if _step_vmem_bytes(bb, tp, q, hp, h2p, out_bytes) <= budget:
                return bb, tp
    return 1, min(tp_cands)


@functools.partial(jax.jit, static_argnames=("block_b", "tile_p", "out_dtype",
                                              "compute_dtype",
                                              "weight_buffer_count"))
def matchnet_forward(proj_p, proj_q, seq_len, wt, bt, wm, bm, *,
                     block_b=None, tile_p=None,
                     out_dtype=jnp.bfloat16, compute_dtype=jnp.bfloat16,
                     weight_buffer_count=1):
    B, P, H = proj_p.shape
    _, Q, _ = proj_q.shape
    H2 = 2 * H

    # ---- lane-dense padding: H (and 2H) rounded up to multiples of 128 ----
    Hp = max(128, -(-H // 128) * 128)
    H2p = 2 * Hp
    out_bytes = np.dtype(out_dtype).itemsize

    # ---- generation-aware VMEM budget and block sizes ----
    phys_vmem = _physical_vmem_bytes()                      # 64 MiB v7x, 128 MiB v5e/v6e
    vmem_limit = min(100 * 1024 * 1024, int(phys_vmem * 0.75))
    budget = max(int(vmem_limit * 0.8) - 2 * _weight_vmem_bytes(Hp, H2p), 1)
    BB, TP = _choose_blocks(B, P, Q, Hp, H2p, out_bytes, budget)
    if block_b is not None:
        BB = block_b
    if tile_p is not None:
        TP = tile_p
    assert B % BB == 0 and P % TP == 0, "block sizes must divide (B, P)"
    grid = (B // BB, P // TP)

    # ---- pre-transpose / pad / cast parameters once on the XLA side ----
    cd = compute_dtype

    def pad2(x, rows, cols):
        return jnp.pad(x, ((0, rows - x.shape[0]), (0, cols - x.shape[1])))

    wt_t = pad2(wt.T.astype(cd), Hp, Hp)               # [Hp,Hp]   multiplies q
    wm1_t = pad2(wm[:, :H].T.astype(cd), Hp, H2p)      # [Hp,2Hp]  multiplies elem_min
    wm2_t = pad2(wm[:, H:].T.astype(cd), Hp, H2p)      # [Hp,2Hp]  multiplies elem_mul
    bt2 = pad2(bt.reshape(1, H).astype(jnp.float32), 1, Hp)
    bm2 = pad2(bm.reshape(1, H2).astype(jnp.float32), 1, H2p)
    p_in = jnp.pad(proj_p.astype(cd), ((0, 0), (0, 0), (0, Hp - H)))
    q_in = jnp.pad(proj_q.astype(cd), ((0, 0), (0, 0), (0, Hp - H)))
    seq_len = seq_len.astype(jnp.int32)

    const_map = lambda g, pt, sl: (0, 0)
    if weight_buffer_count is None:
        wspec = lambda shape: pl.BlockSpec(shape, const_map)
    else:
        # Constant operands: single-buffered -> no double-buffer VMEM waste.
        mode = pl.Buffered(weight_buffer_count)
        wspec = lambda shape: pl.BlockSpec(shape, const_map, pipeline_mode=mode)

    grid_spec = pltpu.PrefetchScalarGridSpec(
        num_scalar_prefetch=1,
        grid=grid,
        in_specs=[
            pl.BlockSpec((BB, TP, Hp), lambda g, pt, sl: (g, pt, 0)),  # proj_p
            pl.BlockSpec((BB, Q, Hp), lambda g, pt, sl: (g, 0, 0)),    # proj_q
            wspec((Hp, Hp)),                                           # Wt^T
            wspec((1, Hp)),                                            # bt
            wspec((Hp, H2p)),                                          # Wm[:, :H]^T
            wspec((Hp, H2p)),                                          # Wm[:, H:]^T
            wspec((1, H2p)),                                           # bm
        ],
        out_specs=pl.BlockSpec((BB, TP, H2p), lambda g, pt, sl: (g, pt, 0)),
        scratch_shapes=[pltpu.VMEM((BB, Q, Hp), cd)],   # trans_q cache
    )

    out_p = pl.pallas_call(
        matchnet_kernel,
        out_shape=jax.ShapeDtypeStruct((B, P, H2p), out_dtype),
        grid_spec=grid_spec,
        compiler_params=pltpu.CompilerParams(
            # Batch axis is independent -> parallel (megacore). The P-tile axis
            # must run in order because trans_q is cached at p_tile == 0.
            dimension_semantics=("parallel", "arbitrary"),
            vmem_limit_bytes=vmem_limit,
        ),
    )(seq_len, p_in, q_in, wt_t, bt2, wm1_t, wm2_t, bm2)

    return out_p[..., :H2] if H2p != H2 else out_p


def matchnet_reference(proj_p, proj_q, seq_len, wt, bt, wm, bm,
                       compute_dtype=jnp.bfloat16):
    """Pure-JAX reference mirroring the PyTorch forward (and the kernel's
    bf16-matmul / f32-accumulate numerics) for the correctness check."""
    cd = compute_dtype
    H = proj_p.shape[-1]
    p = proj_p.astype(cd)
    q = proj_q.astype(cd)
    trans_q = (jnp.einsum("bqh,hk->bqk", q, wt.T.astype(cd),
                          preferred_element_type=jnp.float32)
               + bt.astype(jnp.float32)).astype(cd)
    scores = jnp.einsum("bph,bqh->bpq", p, trans_q,
                        preferred_element_type=jnp.float32)
    B, P, Q = scores.shape
    col = jnp.arange(Q)[None, None, :]
    mask = (col < seq_len[:, None, None]).astype(jnp.float32)
    v = scores * mask
    soft = jax.nn.softmax(v, axis=-1)
    res = soft * mask
    att_norm = res / (jnp.sum(res, axis=-1, keepdims=True) + 1e-13)
    att_vec = jnp.einsum("bpq,bqh->bph", att_norm.astype(cd), q,
                         preferred_element_type=jnp.float32)
    p32 = p.astype(jnp.float32)
    elem_min = att_vec - p32
    elem_mul = att_vec * p32
    all_con = jnp.concatenate([elem_min, elem_mul], axis=2).astype(cd)
    out = (jnp.einsum("bpk,kj->bpj", all_con, wm.T.astype(cd),
                      preferred_element_type=jnp.float32)
           + bm.astype(jnp.float32))
    return jax.nn.relu(out)


if __name__ == "__main__":
    # Small shapes consistent with the module: hidden H, passage P / question Q.
    B, P, Q, H = 2, 8, 8, 32
    H2 = 2 * H

    key = jax.random.PRNGKey(0)
    kp, kq, kwt, kbt, kwm, kbm = jax.random.split(key, 6)

    proj_p = jax.random.normal(kp, (B, P, H), dtype=jnp.float32)
    proj_q = jax.random.normal(kq, (B, Q, H), dtype=jnp.float32)
    seq_len = jnp.array([5, 8], dtype=jnp.int32)   # per-batch valid lengths over Q

    # torch.nn.Linear shapes: W:[out,in], b:[out]
    wt = jax.random.normal(kwt, (H, H), dtype=jnp.float32) * 0.1    # trans_linear
    bt = jax.random.normal(kbt, (H,), dtype=jnp.float32) * 0.1
    wm = jax.random.normal(kwm, (H2, H2), dtype=jnp.float32) * 0.1  # map_linear
    bm = jax.random.normal(kbm, (H2,), dtype=jnp.float32) * 0.1

    try:
        out = jax.block_until_ready(
            matchnet_forward(proj_p, proj_q, seq_len, wt, bt, wm, bm))
    except Exception:
        # Fallback in case this Pallas build rejects single-buffered constant
        # BlockSpecs (pl.Buffered(1)); numerics/semantics are identical.
        out = jax.block_until_ready(
            matchnet_forward(proj_p, proj_q, seq_len, wt, bt, wm, bm,
                             weight_buffer_count=None))

    ref = matchnet_reference(proj_p, proj_q, seq_len, wt, bt, wm, bm)
    # Tolerance covers the approx-reciprocal softmax normalization and the
    # bf16 output rounding; the bf16 matmul rounding is mirrored in the ref.
    np.testing.assert_allclose(np.asarray(out.astype(jnp.float32)),
                               np.asarray(ref), rtol=2e-2, atol=2e-2)

    print("KERNEL_OK")
</pallas_src>

<mosaic_0001>
module attributes {stable_mosaic.version = 11 : i64} {
  func.func @matchnet_kernel(%arg0: i32, %arg1: i32, %arg2: memref<2xi32, #tpu.memory_space<smem>>, %arg3: memref<1x8x128xbf16, #tpu.memory_space<vmem>>, %arg4: memref<1x8x128xbf16, #tpu.memory_space<vmem>>, %arg5: memref<128x128xbf16, #tpu.memory_space<vmem>>, %arg6: memref<1x128xf32, #tpu.memory_space<vmem>>, %arg7: memref<128x256xbf16, #tpu.memory_space<vmem>>, %arg8: memref<128x256xbf16, #tpu.memory_space<vmem>>, %arg9: memref<1x256xf32, #tpu.memory_space<vmem>>, %arg10: memref<1x8x256xbf16, #tpu.memory_space<vmem>>, %arg11: memref<1x8x128xbf16, #tpu.memory_space<vmem>>) attributes {dimension_semantics = [#tpu.dimension_semantics<parallel>, #tpu.dimension_semantics<arbitrary>], iteration_bounds = array<i64: 2, 1>, scalar_prefetch = 1 : i64, scratch_operands = 1 : i64, tpu.core_type = #tpu.core_type<tc>, window_params = [{transform_indices = @transform_0, window_bounds = array<i64: 1, 8, 128>}, {transform_indices = @transform_1, window_bounds = array<i64: 1, 8, 128>}, {pipeline_mode = #tpu.pipeline_mode<synchronous>, transform_indices = @transform_2, window_bounds = array<i64: 128, 128>}, {pipeline_mode = #tpu.pipeline_mode<synchronous>, transform_indices = @transform_3, window_bounds = array<i64: 1, 128>}, {pipeline_mode = #tpu.pipeline_mode<synchronous>, transform_indices = @transform_4, window_bounds = array<i64: 128, 256>}, {pipeline_mode = #tpu.pipeline_mode<synchronous>, transform_indices = @transform_5, window_bounds = array<i64: 128, 256>}, {pipeline_mode = #tpu.pipeline_mode<synchronous>, transform_indices = @transform_6, window_bounds = array<i64: 1, 256>}, {transform_indices = @transform_7, window_bounds = array<i64: 1, 8, 256>}]} {
    %c1_i32 = arith.constant 1 : i32
    %0 = arith.muli %arg0, %c1_i32 : i32
    %c0_i32 = arith.constant 0 : i32
    %1 = arith.cmpi eq, %arg1, %c0_i32 : i32
    %2 = arith.extui %1 : i1 to i32
    %c0_i32_0 = arith.constant 0 : i32
    %3 = arith.cmpi ne, %2, %c0_i32_0 : i32
    scf.if %3 {
      %c0_31 = arith.constant 0 : index
      %c0_32 = arith.constant 0 : index
      %c0_33 = arith.constant 0 : index
      %61 = vector.load %arg4[%c0_31, %c0_32, %c0_33] : memref<1x8x128xbf16, #tpu.memory_space<vmem>>, vector<1x8x128xbf16>
      %62 = vector.shape_cast %61 : vector<1x8x128xbf16> to vector<8x128xbf16>
      %c0_34 = arith.constant 0 : index
      %c0_35 = arith.constant 0 : index
      %63 = vector.load %arg5[%c0_34, %c0_35] : memref<128x128xbf16, #tpu.memory_space<vmem>>, vector<128x128xbf16>
      %cst_36 = arith.constant dense<0.000000e+00> : vector<8x128xf32>
      %64 = tpu.matmul %62, %63, %cst_36 {dimension_numbers = #tpu.dot_dimension_numbers<[1], [0], [0], [1], [0, 0, 1, 1], [], []>} : vector<8x128xbf16>, vector<128x128xbf16>, vector<8x128xf32> -> vector<8x128xf32>
      %c0_37 = arith.constant 0 : index
      %c0_38 = arith.constant 0 : index
      %65 = vector.load %arg6[%c0_37, %c0_38] : memref<1x128xf32, #tpu.memory_space<vmem>>, vector<1x128xf32>
      %66 = vector.broadcast %65 : vector<1x128xf32> to vector<8x128xf32>
      %67 = arith.addf %64, %66 : vector<8x128xf32>
      %68 = vector.shape_cast %67 : vector<8x128xf32> to vector<1x8x128xf32>
      %69 = arith.truncf %68 : vector<1x8x128xf32> to vector<1x8x128xbf16>
      %c0_39 = arith.constant 0 : index
      %c0_40 = arith.constant 0 : index
      %c0_41 = arith.constant 0 : index
      %70 = vector.load %arg11[%c0_39, %c0_40, %c0_41] : memref<1x8x128xbf16, #tpu.memory_space<vmem>>, vector<1x8x128xbf16>
      tpu.vector_store %arg11[%c0_39, %c0_40, %c0_41], %69 {strides = array<i32>} : memref<1x8x128xbf16, #tpu.memory_space<vmem>>, vector<1x8x128xbf16>,
    } else {
    }
    %c0 = arith.constant 0 : index
    %c0_1 = arith.constant 0 : index
    %c0_2 = arith.constant 0 : index
    %4 = vector.load %arg3[%c0, %c0_1, %c0_2] : memref<1x8x128xbf16, #tpu.memory_space<vmem>>, vector<1x8x128xbf16>
    %c0_3 = arith.constant 0 : index
    %c0_4 = arith.constant 0 : index
    %c0_5 = arith.constant 0 : index
    %5 = vector.load %arg4[%c0_3, %c0_4, %c0_5] : memref<1x8x128xbf16, #tpu.memory_space<vmem>>, vector<1x8x128xbf16>
    %c0_6 = arith.constant 0 : index
    %c0_7 = arith.constant 0 : index
    %c0_8 = arith.constant 0 : index
    %6 = vector.load %arg11[%c0_6, %c0_7, %c0_8] : memref<1x8x128xbf16, #tpu.memory_space<vmem>>, vector<1x8x128xbf16>
    "tpu.trace_start"() <{level = 10 : i32, message = "bph,bqh->bpq"}> : () -> ()
    %cst = arith.constant dense<0.000000e+00> : vector<1x8x8xf32>
    %7 = tpu.matmul %4, %6, %cst {dimension_numbers = #tpu.dot_dimension_numbers<[2], [2], [1], [1], [0, 0, 0, 1, 1, 1], [0], [0]>} : vector<1x8x128xbf16>, vector<1x8x128xbf16>, vector<1x8x8xf32> -> vector<1x8x8xf32>
    "tpu.trace_stop"() : () -> ()
    %8 = tpu.iota {dimensions = array<i32: 0>} : vector<1x1x1xi32>
    %c0_i32_9 = arith.constant 0 : i32
    %9 = vector.broadcast %c0_i32_9 : i32 to vector<1x1x1xi32>
    %c0_i32_10 = arith.constant 0 : i32
    %10 = vector.broadcast %c0_i32_10 : i32 to vector<1x1x1xi32>
    %11 = arith.cmpi eq, %8, %10 : vector<1x1x1xi32>
    %c0_i32_11 = arith.constant 0 : i32
    %12 = arith.addi %0, %c0_i32_11 : i32
    %13 = arith.index_cast %12 : i32 to index
    %14 = memref.load %arg2[%13] : memref<2xi32, #tpu.memory_space<smem>>
    %15 = vector.broadcast %14 : i32 to vector<1x1x1xi32>
    %16 = arith.select %11, %15, %9 : vector<1x1x1xi1>, vector<1x1x1xi32>
    %17 = tpu.iota {dimensions = array<i32: 2>} : vector<1x8x8xi32>
    %18 = vector.broadcast %16 : vector<1x1x1xi32> to vector<1x8x8xi32>
    %19 = arith.cmpi slt, %17, %18 : vector<1x8x8xi32>
    %cst_12 = arith.constant 0.000000e+00 : f32
    %20 = vector.broadcast %cst_12 : f32 to vector<1x8x8xf32>
    %21 = arith.select %19, %7, %20 : vector<1x8x8xi1>, vector<1x8x8xf32>
    %cst_13 = arith.constant dense<0xFF800000> : vector<1x8xf32>
    %22 = vector.multi_reduction <maximumf>, %21, %cst_13 [2] : vector<1x8x8xf32> to vector<1x8xf32>
    %23 = vector.shape_cast %22 : vector<1x8xf32> to vector<1x8x1xf32>
    %24 = vector.broadcast %23 : vector<1x8x1xf32> to vector<1x8x8xf32>
    %25 = arith.subf %21, %24 : vector<1x8x8xf32>
    %26 = math.exp %25 : vector<1x8x8xf32>
    %cst_14 = arith.constant dense<0.000000e+00> : vector<1x8xf32>
    %27 = vector.multi_reduction <add>, %26, %cst_14 [2] : vector<1x8x8xf32> to vector<1x8xf32>
    %28 = vector.shape_cast %27 : vector<1x8xf32> to vector<1x8x1xf32>
    %cst_15 = arith.constant 0.000000e+00 : f32
    %29 = vector.broadcast %cst_15 : f32 to vector<1x8x8xf32>
    %30 = arith.select %19, %26, %29 : vector<1x8x8xi1>, vector<1x8x8xf32>
    %cst_16 = arith.constant dense<0.000000e+00> : vector<1x8xf32>
    %31 = vector.multi_reduction <add>, %30, %cst_16 [2] : vector<1x8x8xf32> to vector<1x8xf32>
    %32 = vector.shape_cast %31 : vector<1x8xf32> to vector<1x8x1xf32>
    %cst_17 = arith.constant 9.99999982E-14 : f32
    %33 = vector.broadcast %cst_17 : f32 to vector<1x8x1xf32>
    %34 = arith.mulf %33, %28 : vector<1x8x1xf32>
    %35 = arith.addf %32, %34 : vector<1x8x1xf32>
    %36 = tpu.reciprocal %35 {approx = true} : vector<1x8x1xf32> -> vector<1x8x1xf32>
    %37 = vector.broadcast %36 : vector<1x8x1xf32> to vector<1x8x8xf32>
    %38 = arith.mulf %30, %37 : vector<1x8x8xf32>
    %39 = arith.truncf %38 : vector<1x8x8xf32> to vector<1x8x8xbf16>
    "tpu.trace_start"() <{level = 10 : i32, message = "bpq,bqh->bph"}> : () -> ()
    %cst_18 = arith.constant dense<0.000000e+00> : vector<1x8x128xf32>
    %40 = tpu.matmul %39, %5, %cst_18 {dimension_numbers = #tpu.dot_dimension_numbers<[2], [1], [1], [2], [0, 0, 0, 1, 1, 2], [0], [0]>} : vector<1x8x8xbf16>, vector<1x8x128xbf16>, vector<1x8x128xf32> -> vector<1x8x128xf32>
    "tpu.trace_stop"() : () -> ()
    %41 = arith.extf %4 : vector<1x8x128xbf16> to vector<1x8x128xf32>
    %42 = arith.subf %40, %41 : vector<1x8x128xf32>
    %43 = arith.mulf %40, %41 : vector<1x8x128xf32>
    %44 = vector.shape_cast %42 : vector<1x8x128xf32> to vector<8x128xf32>
    %45 = arith.truncf %44 : vector<8x128xf32> to vector<8x128xbf16>
    %46 = vector.shape_cast %43 : vector<1x8x128xf32> to vector<8x128xf32>
    %47 = arith.truncf %46 : vector<8x128xf32> to vector<8x128xbf16>
    %c0_19 = arith.constant 0 : index
    %c0_20 = arith.constant 0 : index
    %48 = vector.load %arg7[%c0_19, %c0_20] : memref<128x256xbf16, #tpu.memory_space<vmem>>, vector<128x256xbf16>
    %cst_21 = arith.constant dense<0.000000e+00> : vector<8x256xf32>
    %49 = tpu.matmul %45, %48, %cst_21 {dimension_numbers = #tpu.dot_dimension_numbers<[1], [0], [0], [1], [0, 0, 1, 1], [], []>} : vector<8x128xbf16>, vector<128x256xbf16>, vector<8x256xf32> -> vector<8x256xf32>
    %c0_22 = arith.constant 0 : index
    %c0_23 = arith.constant 0 : index
    %50 = vector.load %arg8[%c0_22, %c0_23] : memref<128x256xbf16, #tpu.memory_space<vmem>>, vector<128x256xbf16>
    %cst_24 = arith.constant dense<0.000000e+00> : vector<8x256xf32>
    %51 = tpu.matmul %47, %50, %cst_24 {dimension_numbers = #tpu.dot_dimension_numbers<[1], [0], [0], [1], [0, 0, 1, 1], [], []>} : vector<8x128xbf16>, vector<128x256xbf16>, vector<8x256xf32> -> vector<8x256xf32>
    %52 = arith.addf %49, %51 : vector<8x256xf32>
    %c0_25 = arith.constant 0 : index
    %c0_26 = arith.constant 0 : index
    %53 = vector.load %arg9[%c0_25, %c0_26] : memref<1x256xf32, #tpu.memory_space<vmem>>, vector<1x256xf32>
    %54 = vector.broadcast %53 : vector<1x256xf32> to vector<8x256xf32>
    %55 = arith.addf %52, %54 : vector<8x256xf32>
    %cst_27 = arith.constant 0.000000e+00 : f32
    %56 = vector.broadcast %cst_27 : f32 to vector<8x256xf32>
    %57 = arith.maximumf %55, %56 : vector<8x256xf32>
    %58 = vector.shape_cast %57 : vector<8x256xf32> to vector<1x8x256xf32>
    %59 = arith.truncf %58 : vector<1x8x256xf32> to vector<1x8x256xbf16>
    %c0_28 = arith.constant 0 : index
    %c0_29 = arith.constant 0 : index
    %c0_30 = arith.constant 0 : index
    %60 = vector.load %arg10[%c0_28, %c0_29, %c0_30] : memref<1x8x256xbf16, #tpu.memory_space<vmem>>, vector<1x8x256xbf16>
    tpu.vector_store %arg10[%c0_28, %c0_29, %c0_30], %59 {strides = array<i32>} : memref<1x8x256xbf16, #tpu.memory_space<vmem>>, vector<1x8x256xbf16>,
    return
  }
  func.func @transform_0(%arg0: i32, %arg1: i32, %arg2: memref<2xi32, #tpu.memory_space<smem>>) -> (i32, i32, i32) {
    %c0_i32 = arith.constant 0 : i32
    %c0_i32_0 = arith.constant 0 : i32
    return %arg0, %arg1, %c0_i32 : i32, i32, i32
  }
  func.func @transform_1(%arg0: i32, %arg1: i32, %arg2: memref<2xi32, #tpu.memory_space<smem>>) -> (i32, i32, i32) {
    %c0_i32 = arith.constant 0 : i32
    %c0_i32_0 = arith.constant 0 : i32
    %c0_i32_1 = arith.constant 0 : i32
    return %arg0, %c0_i32, %c0_i32_0 : i32, i32, i32
  }
  func.func @transform_2(%arg0: i32, %arg1: i32, %arg2: memref<2xi32, #tpu.memory_space<smem>>) -> (i32, i32) {
    %c0_i32 = arith.constant 0 : i32
    %c0_i32_0 = arith.constant 0 : i32
    %c0_i32_1 = arith.constant 0 : i32
    return %c0_i32, %c0_i32_0 : i32, i32
  }
  func.func @transform_3(%arg0: i32, %arg1: i32, %arg2: memref<2xi32, #tpu.memory_space<smem>>) -> (i32, i32) {
    %c0_i32 = arith.constant 0 : i32
    %c0_i32_0 = arith.constant 0 : i32
    %c0_i32_1 = arith.constant 0 : i32
    return %c0_i32, %c0_i32_0 : i32, i32
  }
  func.func @transform_4(%arg0: i32, %arg1: i32, %arg2: memref<2xi32, #tpu.memory_space<smem>>) -> (i32, i32) {
    %c0_i32 = arith.constant 0 : i32
    %c0_i32_0 = arith.constant 0 : i32
    %c0_i32_1 = arith.constant 0 : i32
    return %c0_i32, %c0_i32_0 : i32, i32
  }
  func.func @transform_5(%arg0: i32, %arg1: i32, %arg2: memref<2xi32, #tpu.memory_space<smem>>) -> (i32, i32) {
    %c0_i32 = arith.constant 0 : i32
    %c0_i32_0 = arith.constant 0 : i32
    %c0_i32_1 = arith.constant 0 : i32
    return %c0_i32, %c0_i32_0 : i32, i32
  }
  func.func @transform_6(%arg0: i32, %arg1: i32, %arg2: memref<2xi32, #tpu.memory_space<smem>>) -> (i32, i32) {
    %c0_i32 = arith.constant 0 : i32
    %c0_i32_0 = arith.constant 0 : i32
    %c0_i32_1 = arith.constant 0 : i32
    return %c0_i32, %c0_i32_0 : i32, i32
  }
  func.func @transform_7(%arg0: i32, %arg1: i32, %arg2: memref<2xi32, #tpu.memory_space<smem>>) -> (i32, i32, i32) {
    %c0_i32 = arith.constant 0 : i32
    %c0_i32_0 = arith.constant 0 : i32
    return %arg0, %arg1, %c0_i32 : i32, i32, i32
  }
}

module attributes {stable_mosaic.version = 11 : i64} {
  func.func @matchnet_kernel(%arg0: i32, %arg1: i32, %arg2: memref<2xi32, #tpu.memory_space<smem>>, %arg3: memref<1x8x128xbf16, #tpu.memory_space<vmem>>, %arg4: memref<1x8x128xbf16, #tpu.memory_space<vmem>>, %arg5: memref<128x128xbf16, #tpu.memory_space<vmem>>, %arg6: memref<1x128xf32, #tpu.memory_space<vmem>>, %arg7: memref<128x256xbf16, #tpu.memory_space<vmem>>, %arg8: memref<128x256xbf16, #tpu.memory_space<vmem>>, %arg9: memref<1x256xf32, #tpu.memory_space<vmem>>, %arg10: memref<1x8x256xbf16, #tpu.memory_space<vmem>>, %arg11: memref<1x8x128xbf16, #tpu.memory_space<vmem>>) attributes {dimension_semantics = [#tpu.dimension_semantics<parallel>, #tpu.dimension_semantics<arbitrary>], iteration_bounds = array<i64: 2, 1>, scalar_prefetch = 1 : i64, scratch_operands = 1 : i64, tpu.core_type = #tpu.core_type<tc>, window_params = [{transform_indices = @transform_0, window_bounds = array<i64: 1, 8, 128>}, {transform_indices = @transform_1, window_bounds = array<i64: 1, 8, 128>}, {pipeline_mode = #tpu.pipeline_mode<synchronous>, transform_indices = @transform_2, window_bounds = array<i64: 128, 128>}, {pipeline_mode = #tpu.pipeline_mode<synchronous>, transform_indices = @transform_3, window_bounds = array<i64: 1, 128>}, {pipeline_mode = #tpu.pipeline_mode<synchronous>, transform_indices = @transform_4, window_bounds = array<i64: 128, 256>}, {pipeline_mode = #tpu.pipeline_mode<synchronous>, transform_indices = @transform_5, window_bounds = array<i64: 128, 256>}, {pipeline_mode = #tpu.pipeline_mode<synchronous>, transform_indices = @transform_6, window_bounds = array<i64: 1, 256>}, {transform_indices = @transform_7, window_bounds = array<i64: 1, 8, 256>}]} {
    %c1_i32 = arith.constant 1 : i32
    %0 = arith.muli %arg0, %c1_i32 : i32
    %c0_i32 = arith.constant 0 : i32
    %1 = arith.cmpi eq, %arg1, %c0_i32 : i32
    %2 = arith.extui %1 : i1 to i32
    %c0_i32_0 = arith.constant 0 : i32
    %3 = arith.cmpi ne, %2, %c0_i32_0 : i32
    scf.if %3 {
      %c0_31 = arith.constant 0 : index
      %c0_32 = arith.constant 0 : index
      %c0_33 = arith.constant 0 : index
      %61 = vector.load %arg4[%c0_31, %c0_32, %c0_33] : memref<1x8x128xbf16, #tpu.memory_space<vmem>>, vector<1x8x128xbf16>
      %62 = vector.shape_cast %61 : vector<1x8x128xbf16> to vector<8x128xbf16>
      %c0_34 = arith.constant 0 : index
      %c0_35 = arith.constant 0 : index
      %63 = vector.load %arg5[%c0_34, %c0_35] : memref<128x128xbf16, #tpu.memory_space<vmem>>, vector<128x128xbf16>
      %cst_36 = arith.constant dense<0.000000e+00> : vector<8x128xf32>
      %64 = tpu.matmul %62, %63, %cst_36 {dimension_numbers = #tpu.dot_dimension_numbers<[1], [0], [0], [1], [0, 0, 1, 1], [], []>} : vector<8x128xbf16>, vector<128x128xbf16>, vector<8x128xf32> -> vector<8x128xf32>
      %c0_37 = arith.constant 0 : index
      %c0_38 = arith.constant 0 : index
      %65 = vector.load %arg6[%c0_37, %c0_38] : memref<1x128xf32, #tpu.memory_space<vmem>>, vector<1x128xf32>
      %66 = vector.broadcast %65 : vector<1x128xf32> to vector<8x128xf32>
      %67 = arith.addf %64, %66 : vector<8x128xf32>
      %68 = vector.shape_cast %67 : vector<8x128xf32> to vector<1x8x128xf32>
      %69 = arith.truncf %68 : vector<1x8x128xf32> to vector<1x8x128xbf16>
      %c0_39 = arith.constant 0 : index
      %c0_40 = arith.constant 0 : index
      %c0_41 = arith.constant 0 : index
      %70 = vector.load %arg11[%c0_39, %c0_40, %c0_41] : memref<1x8x128xbf16, #tpu.memory_space<vmem>>, vector<1x8x128xbf16>
      tpu.vector_store %arg11[%c0_39, %c0_40, %c0_41], %69 {strides = array<i32>} : memref<1x8x128xbf16, #tpu.memory_space<vmem>>, vector<1x8x128xbf16>,
    } else {
    }
    %c0 = arith.constant 0 : index
    %c0_1 = arith.constant 0 : index
    %c0_2 = arith.constant 0 : index
    %4 = vector.load %arg3[%c0, %c0_1, %c0_2] : memref<1x8x128xbf16, #tpu.memory_space<vmem>>, vector<1x8x128xbf16>
    %c0_3 = arith.constant 0 : index
    %c0_4 = arith.constant 0 : index
    %c0_5 = arith.constant 0 : index
    %5 = vector.load %arg4[%c0_3, %c0_4, %c0_5] : memref<1x8x128xbf16, #tpu.memory_space<vmem>>, vector<1x8x128xbf16>
    %c0_6 = arith.constant 0 : index
    %c0_7 = arith.constant 0 : index
    %c0_8 = arith.constant 0 : index
    %6 = vector.load %arg11[%c0_6, %c0_7, %c0_8] : memref<1x8x128xbf16, #tpu.memory_space<vmem>>, vector<1x8x128xbf16>
    "tpu.trace_start"() <{level = 10 : i32, message = "bph,bqh->bpq"}> : () -> ()
    %cst = arith.constant dense<0.000000e+00> : vector<1x8x8xf32>
    %7 = tpu.matmul %4, %6, %cst {dimension_numbers = #tpu.dot_dimension_numbers<[2], [2], [1], [1], [0, 0, 0, 1, 1, 1], [0], [0]>} : vector<1x8x128xbf16>, vector<1x8x128xbf16>, vector<1x8x8xf32> -> vector<1x8x8xf32>
    "tpu.trace_stop"() : () -> ()
    %8 = tpu.iota {dimensions = array<i32: 0>} : vector<1x1x1xi32>
    %c0_i32_9 = arith.constant 0 : i32
    %9 = vector.broadcast %c0_i32_9 : i32 to vector<1x1x1xi32>
    %c0_i32_10 = arith.constant 0 : i32
    %10 = vector.broadcast %c0_i32_10 : i32 to vector<1x1x1xi32>
    %11 = arith.cmpi eq, %8, %10 : vector<1x1x1xi32>
    %c0_i32_11 = arith.constant 0 : i32
    %12 = arith.addi %0, %c0_i32_11 : i32
    %13 = arith.index_cast %12 : i32 to index
    %14 = memref.load %arg2[%13] : memref<2xi32, #tpu.memory_space<smem>>
    %15 = vector.broadcast %14 : i32 to vector<1x1x1xi32>
    %16 = arith.select %11, %15, %9 : vector<1x1x1xi1>, vector<1x1x1xi32>
    %17 = tpu.iota {dimensions = array<i32: 2>} : vector<1x8x8xi32>
    %18 = vector.broadcast %16 : vector<1x1x1xi32> to vector<1x8x8xi32>
    %19 = arith.cmpi slt, %17, %18 : vector<1x8x8xi32>
    %cst_12 = arith.constant 0.000000e+00 : f32
    %20 = vector.broadcast %cst_12 : f32 to vector<1x8x8xf32>
    %21 = arith.select %19, %7, %20 : vector<1x8x8xi1>, vector<1x8x8xf32>
    %cst_13 = arith.constant dense<0xFF800000> : vector<1x8xf32>
    %22 = vector.multi_reduction <maximumf>, %21, %cst_13 [2] : vector<1x8x8xf32> to vector<1x8xf32>
    %23 = vector.shape_cast %22 : vector<1x8xf32> to vector<1x8x1xf32>
    %24 = vector.broadcast %23 : vector<1x8x1xf32> to vector<1x8x8xf32>
    %25 = arith.subf %21, %24 : vector<1x8x8xf32>
    %26 = math.exp %25 : vector<1x8x8xf32>
    %cst_14 = arith.constant dense<0.000000e+00> : vector<1x8xf32>
    %27 = vector.multi_reduction <add>, %26, %cst_14 [2] : vector<1x8x8xf32> to vector<1x8xf32>
    %28 = vector.shape_cast %27 : vector<1x8xf32> to vector<1x8x1xf32>
    %cst_15 = arith.constant 0.000000e+00 : f32
    %29 = vector.broadcast %cst_15 : f32 to vector<1x8x8xf32>
    %30 = arith.select %19, %26, %29 : vector<1x8x8xi1>, vector<1x8x8xf32>
    %cst_16 = arith.constant dense<0.000000e+00> : vector<1x8xf32>
    %31 = vector.multi_reduction <add>, %30, %cst_16 [2] : vector<1x8x8xf32> to vector<1x8xf32>
    %32 = vector.shape_cast %31 : vector<1x8xf32> to vector<1x8x1xf32>
    %cst_17 = arith.constant 9.99999982E-14 : f32
    %33 = vector.broadcast %cst_17 : f32 to vector<1x8x1xf32>
    %34 = arith.mulf %33, %28 : vector<1x8x1xf32>
    %35 = arith.addf %32, %34 : vector<1x8x1xf32>
    %36 = tpu.reciprocal %35 {approx = true} : vector<1x8x1xf32> -> vector<1x8x1xf32>
    %37 = vector.broadcast %36 : vector<1x8x1xf32> to vector<1x8x8xf32>
    %38 = arith.mulf %30, %37 : vector<1x8x8xf32>
    %39 = arith.truncf %38 : vector<1x8x8xf32> to vector<1x8x8xbf16>
    "tpu.trace_start"() <{level = 10 : i32, message = "bpq,bqh->bph"}> : () -> ()
    %cst_18 = arith.constant dense<0.000000e+00> : vector<1x8x128xf32>
    %40 = tpu.matmul %39, %5, %cst_18 {dimension_numbers = #tpu.dot_dimension_numbers<[2], [1], [1], [2], [0, 0, 0, 1, 1, 2], [0], [0]>} : vector<1x8x8xbf16>, vector<1x8x128xbf16>, vector<1x8x128xf32> -> vector<1x8x128xf32>
    "tpu.trace_stop"() : () -> ()
    %41 = arith.extf %4 : vector<1x8x128xbf16> to vector<1x8x128xf32>
    %42 = arith.subf %40, %41 : vector<1x8x128xf32>
    %43 = arith.mulf %40, %41 : vector<1x8x128xf32>
    %44 = vector.shape_cast %42 : vector<1x8x128xf32> to vector<8x128xf32>
    %45 = arith.truncf %44 : vector<8x128xf32> to vector<8x128xbf16>
    %46 = vector.shape_cast %43 : vector<1x8x128xf32> to vector<8x128xf32>
    %47 = arith.truncf %46 : vector<8x128xf32> to vector<8x128xbf16>
    %c0_19 = arith.constant 0 : index
    %c0_20 = arith.constant 0 : index
    %48 = vector.load %arg7[%c0_19, %c0_20] : memref<128x256xbf16, #tpu.memory_space<vmem>>, vector<128x256xbf16>
    %cst_21 = arith.constant dense<0.000000e+00> : vector<8x256xf32>
    %49 = tpu.matmul %45, %48, %cst_21 {dimension_numbers = #tpu.dot_dimension_numbers<[1], [0], [0], [1], [0, 0, 1, 1], [], []>} : vector<8x128xbf16>, vector<128x256xbf16>, vector<8x256xf32> -> vector<8x256xf32>
    %c0_22 = arith.constant 0 : index
    %c0_23 = arith.constant 0 : index
    %50 = vector.load %arg8[%c0_22, %c0_23] : memref<128x256xbf16, #tpu.memory_space<vmem>>, vector<128x256xbf16>
    %cst_24 = arith.constant dense<0.000000e+00> : vector<8x256xf32>
    %51 = tpu.matmul %47, %50, %cst_24 {dimension_numbers = #tpu.dot_dimension_numbers<[1], [0], [0], [1], [0, 0, 1, 1], [], []>} : vector<8x128xbf16>, vector<128x256xbf16>, vector<8x256xf32> -> vector<8x256xf32>
    %52 = arith.addf %49, %51 : vector<8x256xf32>
    %c0_25 = arith.constant 0 : index
    %c0_26 = arith.constant 0 : index
    %53 = vector.load %arg9[%c0_25, %c0_26] : memref<1x256xf32, #tpu.memory_space<vmem>>, vector<1x256xf32>
    %54 = vector.broadcast %53 : vector<1x256xf32> to vector<8x256xf32>
    %55 = arith.addf %52, %54 : vector<8x256xf32>
    %cst_27 = arith.constant 0.000000e+00 : f32
    %56 = vector.broadcast %cst_27 : f32 to vector<8x256xf32>
    %57 = arith.maximumf %55, %56 : vector<8x256xf32>
    %58 = vector.shape_cast %57 : vector<8x256xf32> to vector<1x8x256xf32>
    %59 = arith.truncf %58 : vector<1x8x256xf32> to vector<1x8x256xbf16>
    %c0_28 = arith.constant 0 : index
    %c0_29 = arith.constant 0 : index
    %c0_30 = arith.constant 0 : index
    %60 = vector.load %arg10[%c0_28, %c0_29, %c0_30] : memref<1x8x256xbf16, #tpu.memory_space<vmem>>, vector<1x8x256xbf16>
    tpu.vector_store %arg10[%c0_28, %c0_29, %c0_30], %59 {strides = array<i32>} : memref<1x8x256xbf16, #tpu.memory_space<vmem>>, vector<1x8x256xbf16>,
    return
  }
  func.func @transform_0(%arg0: i32, %arg1: i32, %arg2: memref<2xi32, #tpu.memory_space<smem>>) -> (i32, i32, i32) {
    %c0_i32 = arith.constant 0 : i32
    %c0_i32_0 = arith.constant 0 : i32
    return %arg0, %arg1, %c0_i32 : i32, i32, i32
  }
  func.func @transform_1(%arg0: i32, %arg1: i32, %arg2: memref<2xi32, #tpu.memory_space<smem>>) -> (i32, i32, i32) {
    %c0_i32 = arith.constant 0 : i32
    %c0_i32_0 = arith.constant 0 : i32
    %c0_i32_1 = arith.constant 0 : i32
    return %arg0, %c0_i32, %c0_i32_0 : i32, i32, i32
  }
  func.func @transform_2(%arg0: i32, %arg1: i32, %arg2: memref<2xi32, #tpu.memory_space<smem>>) -> (i32, i32) {
    %c0_i32 = arith.constant 0 : i32
    %c0_i32_0 = arith.constant 0 : i32
    %c0_i32_1 = arith.constant 0 : i32
    return %c0_i32, %c0_i32_0 : i32, i32
  }
  func.func @transform_3(%arg0: i32, %arg1: i32, %arg2: memref<2xi32, #tpu.memory_space<smem>>) -> (i32, i32) {
    %c0_i32 = arith.constant 0 : i32
    %c0_i32_0 = arith.constant 0 : i32
    %c0_i32_1 = arith.constant 0 : i32
    return %c0_i32, %c0_i32_0 : i32, i32
  }
  func.func @transform_4(%arg0: i32, %arg1: i32, %arg2: memref<2xi32, #tpu.memory_space<smem>>) -> (i32, i32) {
    %c0_i32 = arith.constant 0 : i32
    %c0_i32_0 = arith.constant 0 : i32
    %c0_i32_1 = arith.constant 0 : i32
    return %c0_i32, %c0_i32_0 : i32, i32
  }
  func.func @transform_5(%arg0: i32, %arg1: i32, %arg2: memref<2xi32, #tpu.memory_space<smem>>) -> (i32, i32) {
    %c0_i32 = arith.constant 0 : i32
    %c0_i32_0 = arith.constant 0 : i32
    %c0_i32_1 = arith.constant 0 : i32
    return %c0_i32, %c0_i32_0 : i32, i32
  }
  func.func @transform_6(%arg0: i32, %arg1: i32, %arg2: memref<2xi32, #tpu.memory_space<smem>>) -> (i32, i32) {
    %c0_i32 = arith.constant 0 : i32
    %c0_i32_0 = arith.constant 0 : i32
    %c0_i32_1 = arith.constant 0 : i32
    return %c0_i32, %c0_i32_0 : i32, i32
  }
  func.func @transform_7(%arg0: i32, %arg1: i32, %arg2: memref<2xi32, #tpu.memory_space<smem>>) -> (i32, i32, i32) {
    %c0_i32 = arith.constant 0 : i32
    %c0_i32_0 = arith.constant 0 : i32
    return %arg0, %arg1, %c0_i32 : i32, i32, i32
  }
}

</mosaic_0001>

<llo_original>
// kernel: matchnet_forward.1
$region0: #{matchnet_forward.1}
  #allocation0 [shape = 'u32[]', space=smem, size = 0x4, offset = 0x4, fixed_abs, tag = 'smem constant byte address 0x4 - core index']
  #allocation1 [shape = 'u32[72,128]{1,0:T(1,128)}', space=vmem, size = 0x9000, scoped, tag = 'internal scratch']
  #allocation2 [shape = 'bf16[1,8,128]{2,1,0:T(8,128)(2,1)}', space=vmem, size = 0x800, scoped, tag = 'scratch operand']
  #allocation3 [shape = 's32[1]{0}', space=sflag, size = 0x4, scoped, tag = 'scoped memory for matchnet_forward.1']
  #allocation4 [shape = 'u8[512]{0}', space=smem, size = 0x200, scoped, tag = 'prefetched SMEM operand 0']
  %s0 = inlined_call_operand.vmem [shape: s32[2], index: 0, kind: input, shape index: {}]
  %s1 = inlined_call_operand.vmem [shape: bf16[2,8,128], index: 1, kind: input, shape index: {}]
  %s2 = inlined_call_operand.vmem [shape: bf16[2,8,128], index: 2, kind: input, shape index: {}]
  %s3 = inlined_call_operand.vmem [shape: bf16[128,128], index: 3, kind: input, shape index: {}]
  %s4 = inlined_call_operand.vmem [shape: f32[1,128], index: 4, kind: input, shape index: {}]
  %s5 = inlined_call_operand.vmem [shape: bf16[128,256], index: 5, kind: input, shape index: {}]
  %s6 = inlined_call_operand.vmem [shape: bf16[128,256], index: 6, kind: input, shape index: {}]
  %s7 = inlined_call_operand.vmem [shape: f32[1,256], index: 7, kind: input, shape index: {}]
  %s8 = inlined_call_operand.vmem [shape: bf16[2,8,256], index: 8, kind: output, shape index: {}]
  %s9 = sld [smem:[#allocation0]]
  $region65: #{matchnet_forward.1} parent=0
    _
  %s11 = ssub.s32 1, %s9
  %s12 = scalar_select 0, %s11, %s9
  %s14 = sshll.u32 %s0, 4
  %s15 = int_to_ptr.vmem [resolvable:$true] %s14
  %17 = dma.vmem_to_smem %s15, 16, [#allocation4], [#allocation3]
  %19 = dma.done [#allocation3], 16
  %20 = sfence
  loop: start=0, step=1, limit=4
  $region2: #{matchnet_forward.1} parent=0 // loop_pre_header
    _
  $region3: #{matchnet_forward.1} parent=0 // loop_header
    %s22 = sphi 0, %s26
    %p23 = scmp.ge.s32.totalorder %s22, 4
    %s29 = sphi 0, %s41
    %s30 = sphi 0, %s37
    %s31 = sphi 0, %s29
    %s32 = sphi 0, %s30
    %s33 = sphi 0, %s31
    %s34 = sphi 0, %s32
    %s46 = sphi 0, %s48
    %s49 = sphi 0, %s46
    %s50 = sphi 0, %s49
    %s66 = sphi 0, %s50
    %s72 = sphi 0, %s74
    %s75 = sphi 0, %s72
    %s76 = sphi 0, %s75
    %s92 = sphi 0, %s76
    %s96 = sphi 0, %s96
    %s98 = sphi 0, %s96
    %s99 = sphi 0, %s98
    %s113 = sphi 0, %s99
    %s117 = sphi 0, %s117
    %s119 = sphi 0, %s117
    %s120 = sphi 0, %s119
    %s134 = sphi 0, %s120
    %s138 = sphi 0, %s138
    %s140 = sphi 0, %s138
    %s141 = sphi 0, %s140
    %s155 = sphi 0, %s141
    %s159 = sphi 0, %s159
    %s161 = sphi 0, %s159
    %s162 = sphi 0, %s161
    %s176 = sphi 0, %s162
    %s180 = sphi 0, %s180
    %s182 = sphi 0, %s180
    %s183 = sphi 0, %s182
    %s197 = sphi 0, %s183
    %s205 = sphi 0, %s207
    %s208 = sphi 0, %s205
    %s209 = sphi 0, %s208
    %s225 = sphi 0, %s209
  $region4: #{matchnet_forward.1} parent=0 // loop_header_branch
    %25 = sbr.rel (%p23) target = $region8
  $region5: #{matchnet_forward.1} parent=0 // loop_body
    %s27 = ssub.s32 %s22, 1
    %s28 = ssub.s32 %s22, 2
    %s35 = sadd.s32 1, %s30
    %p36 = scmp.ge.s32.totalorder %s35, 1
    %s37 = scalar_select %p36, 0, %s35
    %s38 = sadd.s32 1, %s29
    %s39 = scalar_select %p36, %s38, %s29
    %p40 = scmp.ge.s32.totalorder %s39, 2
    %s41 = scalar_select %p40, 0, %s39
    %s42 = ssub.s32 %s29, %s41
    %s43 = ssub.s32 %s30, %s37
    %s44 = sor.u32 %s42, %s43
    %p45 = scmp.eq.s32.totalorder %s44, 0
    %s47 = sadd.s32 %s46, 1
    %s48 = scalar_select %p45, %s46, %s47
    %p51 = pneg %p45
    %p52 = scmp.eq.s32.totalorder %s22, 1
    %p53 = por %p51, %p52
    %p54 = scmp.ne.s32.totalorder %s46, %s49
    %p55 = scmp.eq.s32.totalorder %s22, 0
    %p56 = por %p54, %p55
    %p57 = scmp.ne.s32.totalorder %s46, %s49
    %p58 = scmp.eq.s32.totalorder %s27, 1
    %p59 = por %p57, %p58
    %p60 = scmp.ne.s32.totalorder %s49, %s50
    %p61 = scmp.eq.s32.totalorder %s27, 0
    %p62 = por %p60, %p61
    %p63 = scmp.ne.s32.totalorder %s49, %s50
    %p64 = scmp.eq.s32.totalorder %s28, 1
    %p65 = por %p63, %p64
    %p67 = scmp.ne.s32.totalorder %s50, %s66
    %p68 = scmp.eq.s32.totalorder %s28, 0
    %p69 = por %p67, %p68
    %s70 = ssub.s32 %s29, %s41
    %p71 = scmp.eq.s32.totalorder %s70, 0
    %s73 = sadd.s32 %s72, 1
    %s74 = scalar_select %p71, %s72, %s73
    %p77 = pneg %p71
    %p78 = scmp.eq.s32.totalorder %s22, 1
    %p79 = por %p77, %p78
    %p80 = scmp.ne.s32.totalorder %s72, %s75
    %p81 = scmp.eq.s32.totalorder %s22, 0
    %p82 = por %p80, %p81
    %p83 = scmp.ne.s32.totalorder %s72, %s75
    %p84 = scmp.eq.s32.totalorder %s27, 1
    %p85 = por %p83, %p84
    %p86 = scmp.ne.s32.totalorder %s75, %s76
    %p87 = scmp.eq.s32.totalorder %s27, 0
    %p88 = por %p86, %p87
    %p89 = scmp.ne.s32.totalorder %s75, %s76
    %p90 = scmp.eq.s32.totalorder %s28, 1
    %p91 = por %p89, %p90
    %p93 = scmp.ne.s32.totalorder %s76, %s92
    %p94 = scmp.eq.s32.totalorder %s28, 0
    %p95 = por %p93, %p94
    %s97 = sadd.s32 %s96, 1
    %p100 = scmp.eq.s32.totalorder %s22, 1
    %p101 = scmp.ne.s32.totalorder %s96, %s98
    %p102 = scmp.eq.s32.totalorder %s22, 0
    %p103 = por %p101, %p102
    %p104 = scmp.ne.s32.totalorder %s96, %s98
    %p105 = scmp.eq.s32.totalorder %s27, 1
    %p106 = por %p104, %p105
    %p107 = scmp.ne.s32.totalorder %s98, %s99
    %p108 = scmp.eq.s32.totalorder %s27, 0
    %p109 = por %p107, %p108
    %p110 = scmp.ne.s32.totalorder %s98, %s99
    %p111 = scmp.eq.s32.totalorder %s28, 1
    %p112 = por %p110, %p111
    %p114 = scmp.ne.s32.totalorder %s99, %s113
    %p115 = scmp.eq.s32.totalorder %s28, 0
    %p116 = por %p114, %p115
    %s118 = sadd.s32 %s117, 1
    %p121 = scmp.eq.s32.totalorder %s22, 1
    %p122 = scmp.ne.s32.totalorder %s117, %s119
    %p123 = scmp.eq.s32.totalorder %s22, 0
    %p124 = por %p122, %p123
    %p125 = scmp.ne.s32.totalorder %s117, %s119
    %p126 = scmp.eq.s32.totalorder %s27, 1
    %p127 = por %p125, %p126
    %p128 = scmp.ne.s32.totalorder %s119, %s120
    %p129 = scmp.eq.s32.totalorder %s27, 0
    %p130 = por %p128, %p129
    %p131 = scmp.ne.s32.totalorder %s119, %s120
    %p132 = scmp.eq.s32.totalorder %s28, 1
    %p133 = por %p131, %p132
    %p135 = scmp.ne.s32.totalorder %s120, %s134
    %p136 = scmp.eq.s32.totalorder %s28, 0
    %p137 = por %p135, %p136
    %s139 = sadd.s32 %s138, 1
    %p142 = scmp.eq.s32.totalorder %s22, 1
    %p143 = scmp.ne.s32.totalorder %s138, %s140
    %p144 = scmp.eq.s32.totalorder %s22, 0
    %p145 = por %p143, %p144
    %p146 = scmp.ne.s32.totalorder %s138, %s140
    %p147 = scmp.eq.s32.totalorder %s27, 1
    %p148 = por %p146, %p147
    %p149 = scmp.ne.s32.totalorder %s140, %s141
    %p150 = scmp.eq.s32.totalorder %s27, 0
    %p151 = por %p149, %p150
    %p152 = scmp.ne.s32.totalorder %s140, %s141
    %p153 = scmp.eq.s32.totalorder %s28, 1
    %p154 = por %p152, %p153
    %p156 = scmp.ne.s32.totalorder %s141, %s155
    %p157 = scmp.eq.s32.totalorder %s28, 0
    %p158 = por %p156, %p157
    %s160 = sadd.s32 %s159, 1
    %p163 = scmp.eq.s32.totalorder %s22, 1
    %p164 = scmp.ne.s32.totalorder %s159, %s161
    %p165 = scmp.eq.s32.totalorder %s22, 0
    %p166 = por %p164, %p165
    %p167 = scmp.ne.s32.totalorder %s159, %s161
    %p168 = scmp.eq.s32.totalorder %s27, 1
    %p169 = por %p167, %p168
    %p170 = scmp.ne.s32.totalorder %s161, %s162
    %p171 = scmp.eq.s32.totalorder %s27, 0
    %p172 = por %p170, %p171
    %p173 = scmp.ne.s32.totalorder %s161, %s162
    %p174 = scmp.eq.s32.totalorder %s28, 1
    %p175 = por %p173, %p174
    %p177 = scmp.ne.s32.totalorder %s162, %s176
    %p178 = scmp.eq.s32.totalorder %s28, 0
    %p179 = por %p177, %p178
    %s181 = sadd.s32 %s180, 1
    %p184 = scmp.eq.s32.totalorder %s22, 1
    %p185 = scmp.ne.s32.totalorder %s180, %s182
    %p186 = scmp.eq.s32.totalorder %s22, 0
    %p187 = por %p185, %p186
    %p188 = scmp.ne.s32.totalorder %s180, %s182
    %p189 = scmp.eq.s32.totalorder %s27, 1
    %p190 = por %p188, %p189
    %p191 = scmp.ne.s32.totalorder %s182, %s183
    %p192 = scmp.eq.s32.totalorder %s27, 0
    %p193 = por %p191, %p192
    %p194 = scmp.ne.s32.totalorder %s182, %s183
    %p195 = scmp.eq.s32.totalorder %s28, 1
    %p196 = por %p194, %p195
    %p198 = scmp.ne.s32.totalorder %s183, %s197
    %p199 = scmp.eq.s32.totalorder %s28, 0
    %p200 = por %p198, %p199
    %s201 = ssub.s32 %s29, %s41
    %s202 = ssub.s32 %s30, %s37
    %s203 = sor.u32 %s201, %s202
    %p204 = scmp.eq.s32.totalorder %s203, 0
    %s206 = sadd.s32 %s205, 1
    %s207 = scalar_select %p204, %s205, %s206
    %p210 = pneg %p204
    %p211 = scmp.eq.s32.totalorder %s22, 1
    %p212 = por %p210, %p211
    %p213 = scmp.ne.s32.totalorder %s205, %s208
    %p214 = scmp.eq.s32.totalorder %s22, 0
    %p215 = por %p213, %p214
    %p216 = scmp.ne.s32.totalorder %s205, %s208
    %p217 = scmp.eq.s32.totalorder %s27, 1
    %p218 = por %p216, %p217
    %p219 = scmp.ne.s32.totalorder %s208, %s209
    %p220 = scmp.eq.s32.totalorder %s27, 0
    %p221 = por %p219, %p220
    %p222 = scmp.ne.s32.totalorder %s208, %s209
    %p223 = scmp.eq.s32.totalorder %s28, 1
    %p224 = por %p222, %p223
    %p226 = scmp.ne.s32.totalorder %s209, %s225
    %p227 = scmp.eq.s32.totalorder %s28, 0
    %p228 = por %p226, %p227
    %p229 = scmp.le.s32.totalorder 1, %s22
    %p230 = scmp.lt.s32.totalorder %s22, 3
    %p231 = pnand %p229, %p230
    %p232 = pneg %p231
    // Predicated region
    $region9: #{matchnet_forward.1} parent=5 // pred_check
      _
    $region10: #{matchnet_forward.1} parent=5 // pred_check_branch
      %234 = sbr.rel (%p231) target = $region12
    $region11: #{matchnet_forward.1} parent=5 // pred_region
      %s235 = ssub.s32 %s22, 1
      // Predicated region
      $region13: #{matchnet_forward.1} parent=11 // pred_check
        %p236 = pneg %p109
      $region14: #{matchnet_forward.1} parent=11 // pred_check_branch
        %238 = sbr.rel (%p236) target = $region16
      $region15: #{matchnet_forward.1} parent=11 // pred_region
        _
      $region16: #{matchnet_forward.1} parent=11 // pred_fallthru
        _
      // Predicated region
      $region17: #{matchnet_forward.1} parent=11 // pred_check
        %p239 = pneg %p130
      $region18: #{matchnet_forward.1} parent=11 // pred_check_branch
        %241 = sbr.rel (%p239) target = $region20
      $region19: #{matchnet_forward.1} parent=11 // pred_region
        _
      $region20: #{matchnet_forward.1} parent=11 // pred_fallthru
        _
      // Predicated region
      $region21: #{matchnet_forward.1} parent=11 // pred_check
        %p242 = pneg %p151
      $region22: #{matchnet_forward.1} parent=11 // pred_check_branch
        %244 = sbr.rel (%p242) target = $region24
      $region23: #{matchnet_forward.1} parent=11 // pred_region
        _
      $region24: #{matchnet_forward.1} parent=11 // pred_fallthru
        _
      // Predicated region
      $region25: #{matchnet_forward.1} parent=11 // pred_check
        %p245 = pneg %p172
      $region26: #{matchnet_forward.1} parent=11 // pred_check_branch
        %247 = sbr.rel (%p245) target = $region28
      $region27: #{matchnet_forward.1} parent=11 // pred_region
        _
      $region28: #{matchnet_forward.1} parent=11 // pred_fallthru
        _
      // Predicated region
      $region29: #{matchnet_forward.1} parent=11 // pred_check
        %p248 = pneg %p193
      $region30: #{matchnet_forward.1} parent=11 // pred_check_branch
        %250 = sbr.rel (%p248) target = $region32
      $region31: #{matchnet_forward.1} parent=11 // pred_region
        _
      $region32: #{matchnet_forward.1} parent=11 // pred_fallthru
        _
    $region12: #{matchnet_forward.1} parent=5 // pred_fallthru
      _
    %p251 = scmp.lt.s32.totalorder %s22, 2
    // Predicated region
    $region33: #{matchnet_forward.1} parent=5 // pred_check
      %p252 = pneg %p251
    $region34: #{matchnet_forward.1} parent=5 // pred_check_branch
      %254 = sbr.rel (%p252) target = $region36
    $region35: #{matchnet_forward.1} parent=5 // pred_region
      // Predicated region
      $region37: #{matchnet_forward.1} parent=35 // pred_check
        %p255 = pneg %p56
      $region38: #{matchnet_forward.1} parent=35 // pred_check_branch
        %257 = sbr.rel (%p255) target = $region40
      $region39: #{matchnet_forward.1} parent=35 // pred_region
        %p258 = scmp.lt.s32.totalorder %s29, 1
        %s259 = scalar_select %p258, %s29, 1
        %p260 = scmp.lt.s32.totalorder %s30, 0
        %s261 = scalar_select %p260, %s30, 0
        %s262 = sadd.s32 %s261, %s259
        %s263 = smul.addr %s262, 4
        %s264 = scalar_lea.vmem %s1, %s263
      $region40: #{matchnet_forward.1} parent=35 // pred_fallthru
        _
      // Predicated region
      $region41: #{matchnet_forward.1} parent=35 // pred_check
        %p265 = pneg %p82
      $region42: #{matchnet_forward.1} parent=35 // pred_check_branch
        %267 = sbr.rel (%p265) target = $region44
      $region43: #{matchnet_forward.1} parent=35 // pred_region
        %p268 = scmp.lt.s32.totalorder %s29, 1
        %s269 = scalar_select %p268, %s29, 1
        %s270 = smul.addr %s269, 4
        %s271 = scalar_lea.vmem %s2, %s270
      $region44: #{matchnet_forward.1} parent=35 // pred_fallthru
        _
    $region36: #{matchnet_forward.1} parent=5 // pred_fallthru
      _
    %p272 = scmp.le.s32.totalorder 1, %s22
    %p273 = scmp.lt.s32.totalorder %s22, 3
    %p274 = pnand %p272, %p273
    %p275 = pneg %p274
    // Predicated region
    $region45: #{matchnet_forward.1} parent=5 // pred_check
      _
    $region46: #{matchnet_forward.1} parent=5 // pred_check_branch
      %277 = sbr.rel (%p274) target = $region48
    $region47: #{matchnet_forward.1} parent=5 // pred_region
      %s278 = ssub.s32 %s22, 1
      %p279 = scmp.lt.s32.totalorder %s31, 1
      %s280 = scalar_select %p279, %s31, 1
      %p281 = scmp.lt.s32.totalorder %s32, 0
      %s282 = scalar_select %p281, %s32, 0
      %s283 = sadd.s32 %s282, %s280
      %s284 = smul.addr %s283, 4
      %s285 = scalar_lea.vmem %s1, %s284
      %p286 = pneg %p62
      %p287 = pneg %p59
      %p288 = scmp.lt.s32.totalorder %s31, 1
      %s289 = scalar_select %p288, %s31, 1
      %s290 = smul.addr %s289, 4
      %s291 = scalar_lea.vmem %s2, %s290
      %p292 = pneg %p88
      %p293 = pneg %p85
      %p294 = pneg %p109
      %p295 = pneg %p106
      %p296 = pneg %p130
      %p297 = pneg %p127
      %p298 = pneg %p151
      %p299 = pneg %p148
      %p300 = pneg %p172
      %p301 = pneg %p169
      %p302 = pneg %p193
      %p303 = pneg %p190
      %p304 = pneg %p221
      %p305 = pneg %p218
      %p306 = scmp.lt.s32.totalorder %s31, 1
      %s307 = scalar_select %p306, %s31, 1
      %p308 = scmp.lt.s32.totalorder %s32, 0
      %s309 = scalar_select %p308, %s32, 0
      %s310 = smul.addr %s309, 2
      %s311 = smul.addr %s307, 2
      %s312 = sadd.s32 %s310, %s311
      %s313 = smul.addr %s312, 4
      %s314 = scalar_lea.vmem %s8, %s313
      %p315 = scmp.lt.s32.totalorder %s31, 1
      %s316 = scalar_select %p315, %s31, 1
      %p317 = scmp.lt.s32.totalorder %s32, 0
      %s318 = scalar_select %p317, %s32, 0
      %s319 = sadd.s32 %s318, %s316
      %s320 = smul.addr %s319, 4
      %s321 = scalar_lea.vmem %s1, %s320
      %p322 = scmp.lt.s32.totalorder %s31, 1
      %s323 = scalar_select %p322, %s31, 1
      %s324 = smul.addr %s323, 4
      %s325 = scalar_lea.vmem %s2, %s324
      %p326 = scmp.lt.s32.totalorder %s31, 1
      %s327 = scalar_select %p326, %s31, 1
      %p328 = scmp.lt.s32.totalorder %s32, 0
      %s329 = scalar_select %p328, %s32, 0
      %s330 = smul.addr %s329, 2
      %s331 = smul.addr %s327, 2
      %s332 = sadd.s32 %s330, %s331
      %s333 = smul.addr %s332, 4
      %s334 = scalar_lea.vmem %s8, %s333
      %p336 = scmp.eq.s32.totalorder %s32, 0
      // Predicated region
      $region49: #{matchnet_forward.1} parent=47 // pred_check
        %p337 = pneg %p336
      $region50: #{matchnet_forward.1} parent=47 // pred_check_branch
        %339 = sbr.rel (%p337) target = $region52
      $region51: #{matchnet_forward.1} parent=47 // pred_region
        %v340 = vld [vmem:[%s325] sm:$0xf]
        %v341 = vld [vmem:[%s3] sm:$0xf]
        %v342 = vld [vmem:[%s3 + $0x4] sm:$0xf]
        %v343 = vld [vmem:[%s3 + $0x8] sm:$0xf]
        %v344 = vld [vmem:[%s3 + $0xc] sm:$0xf]
        %v345 = vld [vmem:[%s3 + $0x10] sm:$0xf]
        %v346 = vld [vmem:[%s3 + $0x14] sm:$0xf]
        %v347 = vld [vmem:[%s3 + $0x18] sm:$0xf]
        %v348 = vld [vmem:[%s3 + $0x1c] sm:$0xf]
        %v349 = vld [vmem:[%s3 + $0x20] sm:$0xf]
        %v350 = vld [vmem:[%s3 + $0x24] sm:$0xf]
        %v351 = vld [vmem:[%s3 + $0x28] sm:$0xf]
        %v352 = vld [vmem:[%s3 + $0x2c] sm:$0xf]
        %v353 = vld [vmem:[%s3 + $0x30] sm:$0xf]
        %v354 = vld [vmem:[%s3 + $0x34] sm:$0xf]
        %v355 = vld [vmem:[%s3 + $0x38] sm:$0xf]
        %v356 = vld [vmem:[%s3 + $0x3c] sm:$0xf]
        %v357 = vld [vmem:[%s4] sm:$0x1]
        %v359 = vperm.slane %v357, 0
        %v377 = vunpack.c.l.b16 %v341
        %v378 = vunpack.c.l.b16 %v342
        %v379 = vunpack.c.l.b16 %v343
        %v380 = vunpack.c.l.b16 %v344
        %v381 = vunpack.c.l.b16 %v345
        %v382 = vunpack.c.l.b16 %v346
        %v383 = vunpack.c.l.b16 %v347
        %v384 = vunpack.c.l.b16 %v348
        %v385 = vunpack.c.l.b16 %v349
        %v386 = vunpack.c.l.b16 %v350
        %v387 = vunpack.c.l.b16 %v351
        %v388 = vunpack.c.l.b16 %v352
        %v389 = vunpack.c.l.b16 %v353
        %v390 = vunpack.c.l.b16 %v354
        %v391 = vunpack.c.l.b16 %v355
        %v392 = vunpack.c.l.b16 %v356
        %v393 = vpack.c.b16 %v378, %v377
        %v394 = vpack.c.b16 %v380, %v379
        %v395 = vpack.c.b16 %v382, %v381
        %v396 = vpack.c.b16 %v384, %v383
        %v397 = vpack.c.b16 %v386, %v385
        %v398 = vpack.c.b16 %v388, %v387
        %v399 = vpack.c.b16 %v390, %v389
        %v400 = vpack.c.b16 %v392, %v391
        %409 = vmatpush.bf16.msra.mxu0 %v400
        %410 = vmatpush.bf16.msra.mxu0 %v399
        %411 = vmatpush.bf16.msra.mxu0 %v398
        %412 = vmatpush.bf16.msra.mxu0 %v397
        %413 = vmatpush.bf16.msra.mxu0 %v396
        %414 = vmatpush.bf16.msra.mxu0 %v395
        %415 = vmatpush.bf16.msra.mxu0 %v394
        %416 = vmatpush.bf16.msra.mxu0 %v393
        %417 = vmatmul.bf16.gmra.mxu0 %v340
        %v418 = vpop.f32.mrf.mxu0
        %v419 = vadd.f32 %v359, %v418
        %v420 = vpop.f32.mrf.mxu0
        %421 = vdwg.mxu0
        %v422 = vpack.c.bf16 %v419, %v419
        %423 = vst [vmem:[#allocation2] sm:$0xf] %v422
      $region52: #{matchnet_forward.1} parent=47 // pred_fallthru
        _
      %v424 = vld [vmem:[%s321] sm:$0xf]
      %v425 = vld [vmem:[%s325] sm:$0xf]
      %v426 = vld [vmem:[#allocation2] sm:$0xf]
      %427 = vmatpush.bf16.xpose.msra.mxu0 0
      %428 = vmatpush.bf16.xpose.msra.mxu0 0
      %429 = vmatpush.bf16.xpose.msra.mxu0 0
      %430 = vmatpush.bf16.xpose.msra.mxu0 0
      %431 = vmatpush.bf16.xpose.msra.mxu0 0
      %432 = vmatpush.bf16.xpose.msra.mxu0 0
      %433 = vmatpush.bf16.xpose.msra.mxu0 0
      %434 = vmatpush.bf16.xpose.msra.mxu0 %v426
      %435 = vmatmul.bf16.gmra.mxu0 %v424
      %v436 = vpop.f32.mrf.mxu0
      %v437 = vadd.f32 0.0, %v436
      %v438 = vpop.f32.mrf.mxu0
      %439 = vdwg.mxu0
      %s440 = sld [smem:[#allocation4 + %s31]]
      %v441 = vstv %s440
      %v442 = vlaneseq
      %v443 = vand.u32 %v442, 127
      %vm444 = vcmp.lt.s32.totalorder %v443, %v441
      %v445 = vsel %vm444, %v437, 0.0
      %vm446 = vcmask 64512
      %v447 = vsel %vm446, %v445, -inf
      %448 = vmax.xlane.f32.xlu0 %v447
      %v449 = vpop.xlane.xlu0 %448
      %v450 = vsub.f32 %v445, %v449
      %v451 = vmul.f32 %v450, 1.442695
      %v452 = vpow.pop %v451
      %v453 = vsel %vm446, %v452, 0.0
      %454 = vadd.xlane.f32.xlu0 %v453
      %v455 = vpop.xlane.xlu0 %454
      %v456 = vsel %vm444, %v452, 0.0
      %v457 = vsel %vm446, %v456, 0.0
      %458 = vadd.xlane.f32.xlu0 %v457
      %v459 = vpop.xlane.xlu0 %458
      %v460 = vmul.f32 %v455, 1e-13
      %v461 = vadd.f32 %v459, %v460
      %v462 = vrcp.pop %v461
      %v463 = vmul.f32 %v456, %v462
      %v464 = vpack.c.bf16 %v463, %v463
      %v466 = vsel %vm446, %v464, 0
      %vm468 = vcmask 1043456
      %v470 = vsel %vm468, %v425, 0
      %472 = vmatpush.bf16.msra.mxu0 0
      %473 = vmatpush.bf16.msra.mxu0 0
      %474 = vmatpush.bf16.msra.mxu0 0
      %475 = vmatpush.bf16.msra.mxu0 0
      %476 = vmatpush.bf16.msra.mxu0 0
      %477 = vmatpush.bf16.msra.mxu0 0
      %478 = vmatpush.bf16.msra.mxu0 0
      %479 = vmatpush.bf16.msra.mxu0 %v470
      %480 = vmatmul.bf16.gmra.mxu0 %v466
      %v481 = vpop.f32.mrf.mxu0
      %v482 = vadd.f32 0.0, %v481
      %v483 = vpop.f32.mrf.mxu0
      %484 = vdwg.mxu0
      %v485 = vunpack.c.l.bf16 %v424
      %v486 = vsub.f32 %v482, %v485
      %v487 = vmul.f32 %v482, %v485
      %v488 = vpack.c.bf16 %v486, %v486
      %v489 = vpack.c.bf16 %v487, %v487
      %v490 = vld [vmem:[%s5] sm:$0xff]
      %v491 = vld [vmem:[%s5 + $0x8] sm:$0xff]
      %v492 = vld [vmem:[%s5 + $0x10] sm:$0xff]
      %v493 = vld [vmem:[%s5 + $0x18] sm:$0xff]
      %v494 = vld [vmem:[%s5 + $0x20] sm:$0xff]
      %v495 = vld [vmem:[%s5 + $0x28] sm:$0xff]
      %v496 = vld [vmem:[%s5 + $0x30] sm:$0xff]
      %v497 = vld [vmem:[%s5 + $0x38] sm:$0xff]
      %v498 = vld [vmem:[%s5 + $0x40] sm:$0xff]
      %v499 = vld [vmem:[%s5 + $0x48] sm:$0xff]
      %v500 = vld [vmem:[%s5 + $0x50] sm:$0xff]
      %v501 = vld [vmem:[%s5 + $0x58] sm:$0xff]
      %v502 = vld [vmem:[%s5 + $0x60] sm:$0xff]
      %v503 = vld [vmem:[%s5 + $0x68] sm:$0xff]
      %v504 = vld [vmem:[%s5 + $0x70] sm:$0xff]
      %v505 = vld [vmem:[%s5 + $0x78] sm:$0xff]
      %v506 = vld [vmem:[%s6] sm:$0xff]
      %v507 = vld [vmem:[%s6 + $0x8] sm:$0xff]
      %v508 = vld [vmem:[%s6 + $0x10] sm:$0xff]
      %v509 = vld [vmem:[%s6 + $0x18] sm:$0xff]
      %v510 = vld [vmem:[%s6 + $0x20] sm:$0xff]
      %v511 = vld [vmem:[%s6 + $0x28] sm:$0xff]
      %v512 = vld [vmem:[%s6 + $0x30] sm:$0xff]
      %v513 = vld [vmem:[%s6 + $0x38] sm:$0xff]
      %v514 = vld [vmem:[%s6 + $0x40] sm:$0xff]
      %v515 = vld [vmem:[%s6 + $0x48] sm:$0xff]
      %v516 = vld [vmem:[%s6 + $0x50] sm:$0xff]
      %v517 = vld [vmem:[%s6 + $0x58] sm:$0xff]
      %v518 = vld [vmem:[%s6 + $0x60] sm:$0xff]
      %v519 = vld [vmem:[%s6 + $0x68] sm:$0xff]
      %v520 = vld [vmem:[%s6 + $0x70] sm:$0xff]
      %v521 = vld [vmem:[%s6 + $0x78] sm:$0xff]
      %v538 = vunpack.c.l.b16 %v506
      %v539 = vunpack.c.h.b16 %v506
      %v540 = vunpack.c.l.b16 %v507
      %v541 = vunpack.c.h.b16 %v507
      %v542 = vunpack.c.l.b16 %v508
      %v543 = vunpack.c.h.b16 %v508
      %v544 = vunpack.c.l.b16 %v509
      %v545 = vunpack.c.h.b16 %v509
      %v546 = vunpack.c.l.b16 %v510
      %v547 = vunpack.c.h.b16 %v510
      %v548 = vunpack.c.l.b16 %v511
      %v549 = vunpack.c.h.b16 %v511
      %v550 = vunpack.c.l.b16 %v512
      %v551 = vunpack.c.h.b16 %v512
      %v552 = vunpack.c.l.b16 %v513
      %v553 = vunpack.c.h.b16 %v513
      %v554 = vunpack.c.l.b16 %v514
      %v555 = vunpack.c.h.b16 %v514
      %v556 = vunpack.c.l.b16 %v515
      %v557 = vunpack.c.h.b16 %v515
      %v558 = vunpack.c.l.b16 %v516
      %v559 = vunpack.c.h.b16 %v516
      %v560 = vunpack.c.l.b16 %v517
      %v561 = vunpack.c.h.b16 %v517
      %v562 = vunpack.c.l.b16 %v518
      %v563 = vunpack.c.h.b16 %v518
      %v564 = vunpack.c.l.b16 %v519
      %v565 = vunpack.c.h.b16 %v519
      %v566 = vunpack.c.l.b16 %v520
      %v567 = vunpack.c.h.b16 %v520
      %v568 = vunpack.c.l.b16 %v521
      %v569 = vunpack.c.h.b16 %v521
      %v570 = vpack.c.b16 %v540, %v538
      %v571 = vpack.c.b16 %v541, %v539
      %v572 = vpack.c.b16 %v544, %v542
      %v573 = vpack.c.b16 %v545, %v543
      %v574 = vpack.c.b16 %v548, %v546
      %v575 = vpack.c.b16 %v549, %v547
      %v576 = vpack.c.b16 %v552, %v550
      %v577 = vpack.c.b16 %v553, %v551
      %v578 = vpack.c.b16 %v556, %v554
      %v579 = vpack.c.b16 %v557, %v555
      %v580 = vpack.c.b16 %v560, %v558
      %v581 = vpack.c.b16 %v561, %v559
      %v582 = vpack.c.b16 %v564, %v562
      %v583 = vpack.c.b16 %v565, %v563
      %v584 = vpack.c.b16 %v568, %v566
      %v585 = vpack.c.b16 %v569, %v567
      %602 = vmatpush.bf16.msra.mxu0 %v584
      %603 = vmatpush.bf16.msra.mxu0 %v582
      %604 = vmatpush.bf16.msra.mxu0 %v580
      %605 = vmatpush.bf16.msra.mxu0 %v578
      %606 = vmatpush.bf16.msra.mxu0 %v576
      %607 = vmatpush.bf16.msra.mxu0 %v574
      %608 = vmatpush.bf16.msra.mxu0 %v572
      %609 = vmatpush.bf16.msra.mxu0 %v570
      %610 = vmatmul.bf16.gmra.mxu0 %v489
      %v611 = vpop.f32.mrf.mxu0
      %v612 = vadd.f32 0.0, %v611
      %v613 = vpop.f32.mrf.mxu0
      %614 = vdwg.mxu0
      %615 = vmatpush.bf16.msra.mxu0 %v585
      %616 = vmatpush.bf16.msra.mxu0 %v583
      %617 = vmatpush.bf16.msra.mxu0 %v581
      %618 = vmatpush.bf16.msra.mxu0 %v579
      %619 = vmatpush.bf16.msra.mxu0 %v577
      %620 = vmatpush.bf16.msra.mxu0 %v575
      %621 = vmatpush.bf16.msra.mxu0 %v573
      %622 = vmatpush.bf16.msra.mxu0 %v571
      %623 = vmatmul.bf16.gmra.mxu0 %v489
      %v624 = vpop.f32.mrf.mxu0
      %v625 = vadd.f32 0.0, %v624
      %v626 = vpop.f32.mrf.mxu0
      %627 = vdwg.mxu0
      %v644 = vunpack.c.l.b16 %v490
      %v645 = vunpack.c.h.b16 %v490
      %v646 = vunpack.c.l.b16 %v491
      %v647 = vunpack.c.h.b16 %v491
      %v648 = vunpack.c.l.b16 %v492
      %v649 = vunpack.c.h.b16 %v492
      %v650 = vunpack.c.l.b16 %v493
      %v651 = vunpack.c.h.b16 %v493
      %v652 = vunpack.c.l.b16 %v494
      %v653 = vunpack.c.h.b16 %v494
      %v654 = vunpack.c.l.b16 %v495
      %v655 = vunpack.c.h.b16 %v495
      %v656 = vunpack.c.l.b16 %v496
      %v657 = vunpack.c.h.b16 %v496
      %v658 = vunpack.c.l.b16 %v497
      %v659 = vunpack.c.h.b16 %v497
      %v660 = vunpack.c.l.b16 %v498
      %v661 = vunpack.c.h.b16 %v498
      %v662 = vunpack.c.l.b16 %v499
      %v663 = vunpack.c.h.b16 %v499
      %v664 = vunpack.c.l.b16 %v500
      %v665 = vunpack.c.h.b16 %v500
      %v666 = vunpack.c.l.b16 %v501
      %v667 = vunpack.c.h.b16 %v501
      %v668 = vunpack.c.l.b16 %v502
      %v669 = vunpack.c.h.b16 %v502
      %v670 = vunpack.c.l.b16 %v503
      %v671 = vunpack.c.h.b16 %v503
      %v672 = vunpack.c.l.b16 %v504
      %v673 = vunpack.c.h.b16 %v504
      %v674 = vunpack.c.l.b16 %v505
      %v675 = vunpack.c.h.b16 %v505
      %v676 = vpack.c.b16 %v646, %v644
      %v677 = vpack.c.b16 %v647, %v645
      %v678 = vpack.c.b16 %v650, %v648
      %v679 = vpack.c.b16 %v651, %v649
      %v680 = vpack.c.b16 %v654, %v652
      %v681 = vpack.c.b16 %v655, %v653
      %v682 = vpack.c.b16 %v658, %v656
      %v683 = vpack.c.b16 %v659, %v657
      %v684 = vpack.c.b16 %v662, %v660
      %v685 = vpack.c.b16 %v663, %v661
      %v686 = vpack.c.b16 %v666, %v664
      %v687 = vpack.c.b16 %v667, %v665
      %v688 = vpack.c.b16 %v670, %v668
      %v689 = vpack.c.b16 %v671, %v669
      %v690 = vpack.c.b16 %v674, %v672
      %v691 = vpack.c.b16 %v675, %v673
      %708 = vmatpush.bf16.msra.mxu0 %v690
      %709 = vmatpush.bf16.msra.mxu0 %v688
      %710 = vmatpush.bf16.msra.mxu0 %v686
      %711 = vmatpush.bf16.msra.mxu0 %v684
      %712 = vmatpush.bf16.msra.mxu0 %v682
      %713 = vmatpush.bf16.msra.mxu0 %v680
      %714 = vmatpush.bf16.msra.mxu0 %v678
      %715 = vmatpush.bf16.msra.mxu0 %v676
      %716 = vmatmul.bf16.gmra.mxu0 %v488
      %v717 = vpop.f32.mrf.mxu0
      %v718 = vadd.f32 %v612, %v717
      %v719 = vpop.f32.mrf.mxu0
      %720 = vdwg.mxu0
      %721 = vmatpush.bf16.msra.mxu0 %v691
      %722 = vmatpush.bf16.msra.mxu0 %v689
      %723 = vmatpush.bf16.msra.mxu0 %v687
      %724 = vmatpush.bf16.msra.mxu0 %v685
      %725 = vmatpush.bf16.msra.mxu0 %v683
      %726 = vmatpush.bf16.msra.mxu0 %v681
      %727 = vmatpush.bf16.msra.mxu0 %v679
      %728 = vmatpush.bf16.msra.mxu0 %v677
      %729 = vmatmul.bf16.gmra.mxu0 %v488
      %v730 = vpop.f32.mrf.mxu0
      %v731 = vadd.f32 %v625, %v730
      %v732 = vpop.f32.mrf.mxu0
      %733 = vdwg.mxu0
      %v734 = vld [vmem:[%s7] sm:$0x3]
      %v736 = vperm.slane %v734, 0
      %v737 = vperm.slane %v734, 1
      %v740 = vadd.f32 %v718, %v736
      %v741 = vadd.f32 %v731, %v737
      %v742 = vmax.f32 %v740, 0.0
      %v743 = vmax.f32 %v741, 0.0
      %v744 = vpack.c.bf16 %v743, %v742
      %745 = vst [vmem:[%s334] sm:$0xff] %v744
      %p746 = scmp.lt.s32.totalorder %s31, 1
      %s747 = scalar_select %p746, %s31, 1
      %p748 = scmp.lt.s32.totalorder %s32, 0
      %s749 = scalar_select %p748, %s32, 0
      %s750 = smul.addr %s749, 2
      %s751 = smul.addr %s747, 2
      %s752 = sadd.s32 %s750, %s751
      %s753 = smul.addr %s752, 4
      %s754 = scalar_lea.vmem %s8, %s753
      // Predicated region
      $region53: #{matchnet_forward.1} parent=47 // pred_check
        %p755 = pneg %p218
      $region54: #{matchnet_forward.1} parent=47 // pred_check_branch
        %757 = sbr.rel (%p755) target = $region56
      $region55: #{matchnet_forward.1} parent=47 // pred_region
        _
      $region56: #{matchnet_forward.1} parent=47 // pred_fallthru
        _
    $region48: #{matchnet_forward.1} parent=5 // pred_fallthru
      _
    %p758 = scmp.le.s32.totalorder 2, %s22
    // Predicated region
    $region57: #{matchnet_forward.1} parent=5 // pred_check
      %p759 = pneg %p758
    $region58: #{matchnet_forward.1} parent=5 // pred_check_branch
      %761 = sbr.rel (%p759) target = $region60
    $region59: #{matchnet_forward.1} parent=5 // pred_region
      %s762 = ssub.s32 %s22, 2
      // Predicated region
      $region61: #{matchnet_forward.1} parent=59 // pred_check
        %p763 = pneg %p224
      $region62: #{matchnet_forward.1} parent=59 // pred_check_branch
        %765 = sbr.rel (%p763) target = $region64
      $region63: #{matchnet_forward.1} parent=59 // pred_region
        %p766 = scmp.lt.s32.totalorder %s33, 1
        %s767 = scalar_select %p766, %s33, 1
        %p768 = scmp.lt.s32.totalorder %s34, 0
        %s769 = scalar_select %p768, %s34, 0
        %s770 = smul.addr %s769, 2
        %s771 = smul.addr %s767, 2
        %s772 = sadd.s32 %s770, %s771
        %s773 = smul.addr %s772, 4
        %s774 = scalar_lea.vmem %s8, %s773
      $region64: #{matchnet_forward.1} parent=59 // pred_fallthru
        _
    $region60: #{matchnet_forward.1} parent=5 // pred_fallthru
      _
  $region6: #{matchnet_forward.1} parent=0 // loop_footer
    %s26 = sadd.s32 1, %s22
  $region7: #{matchnet_forward.1} parent=0 // loop_footer_branch
    %21 = sbr.rel target = $region3
  $region8: #{matchnet_forward.1} parent=0 // loop_exit
    _

// kernel: matchnet_forward.1
$region0: #{matchnet_forward.1}
  #allocation0 [shape = 'u32[]', space=smem, size = 0x4, offset = 0x4, fixed_abs, tag = 'smem constant byte address 0x4 - core index']
  #allocation1 [shape = 'u32[72,128]{1,0:T(1,128)}', space=vmem, size = 0x9000, scoped, tag = 'internal scratch']
  #allocation2 [shape = 'bf16[1,8,128]{2,1,0:T(8,128)(2,1)}', space=vmem, size = 0x800, scoped, tag = 'scratch operand']
  #allocation3 [shape = 's32[1]{0}', space=sflag, size = 0x4, scoped, tag = 'scoped memory for matchnet_forward.1']
  #allocation4 [shape = 'u8[512]{0}', space=smem, size = 0x200, scoped, tag = 'prefetched SMEM operand 0']
  %s0 = inlined_call_operand.vmem [shape: s32[2], index: 0, kind: input, shape index: {}]
  %s1 = inlined_call_operand.vmem [shape: bf16[2,8,128], index: 1, kind: input, shape index: {}]
  %s2 = inlined_call_operand.vmem [shape: bf16[2,8,128], index: 2, kind: input, shape index: {}]
  %s3 = inlined_call_operand.vmem [shape: bf16[128,128], index: 3, kind: input, shape index: {}]
  %s4 = inlined_call_operand.vmem [shape: f32[1,128], index: 4, kind: input, shape index: {}]
  %s5 = inlined_call_operand.vmem [shape: bf16[128,256], index: 5, kind: input, shape index: {}]
  %s6 = inlined_call_operand.vmem [shape: bf16[128,256], index: 6, kind: input, shape index: {}]
  %s7 = inlined_call_operand.vmem [shape: f32[1,256], index: 7, kind: input, shape index: {}]
  %s8 = inlined_call_operand.vmem [shape: bf16[2,8,256], index: 8, kind: output, shape index: {}]
  %s9 = sld [smem:[#allocation0]]
  $region65: #{matchnet_forward.1} parent=0
    _
  %s11 = ssub.s32 1, %s9
  %s12 = scalar_select 0, %s11, %s9
  %s14 = sshll.u32 %s0, 4
  %s15 = int_to_ptr.vmem [resolvable:$true] %s14
  %17 = dma.vmem_to_smem %s15, 16, [#allocation4], [#allocation3]
  %19 = dma.done [#allocation3], 16
  %20 = sfence
  loop: start=0, step=1, limit=4
  $region2: #{matchnet_forward.1} parent=0 // loop_pre_header
    _
  $region3: #{matchnet_forward.1} parent=0 // loop_header
    %s22 = sphi 0, %s26
    %p23 = scmp.ge.s32.totalorder %s22, 4
    %s29 = sphi 0, %s41
    %s30 = sphi 0, %s37
    %s31 = sphi 0, %s29
    %s32 = sphi 0, %s30
    %s33 = sphi 0, %s31
    %s34 = sphi 0, %s32
    %s46 = sphi 0, %s48
    %s49 = sphi 0, %s46
    %s50 = sphi 0, %s49
    %s66 = sphi 0, %s50
    %s72 = sphi 0, %s74
    %s75 = sphi 0, %s72
    %s76 = sphi 0, %s75
    %s92 = sphi 0, %s76
    %s96 = sphi 0, %s96
    %s98 = sphi 0, %s96
    %s99 = sphi 0, %s98
    %s113 = sphi 0, %s99
    %s117 = sphi 0, %s117
    %s119 = sphi 0, %s117
    %s120 = sphi 0, %s119
    %s134 = sphi 0, %s120
    %s138 = sphi 0, %s138
    %s140 = sphi 0, %s138
    %s141 = sphi 0, %s140
    %s155 = sphi 0, %s141
    %s159 = sphi 0, %s159
    %s161 = sphi 0, %s159
    %s162 = sphi 0, %s161
    %s176 = sphi 0, %s162
    %s180 = sphi 0, %s180
    %s182 = sphi 0, %s180
    %s183 = sphi 0, %s182
    %s197 = sphi 0, %s183
    %s205 = sphi 0, %s207
    %s208 = sphi 0, %s205
    %s209 = sphi 0, %s208
    %s225 = sphi 0, %s209
  $region4: #{matchnet_forward.1} parent=0 // loop_header_branch
    %25 = sbr.rel (%p23) target = $region8
  $region5: #{matchnet_forward.1} parent=0 // loop_body
    %s27 = ssub.s32 %s22, 1
    %s28 = ssub.s32 %s22, 2
    %s35 = sadd.s32 1, %s30
    %p36 = scmp.ge.s32.totalorder %s35, 1
    %s37 = scalar_select %p36, 0, %s35
    %s38 = sadd.s32 1, %s29
    %s39 = scalar_select %p36, %s38, %s29
    %p40 = scmp.ge.s32.totalorder %s39, 2
    %s41 = scalar_select %p40, 0, %s39
    %s42 = ssub.s32 %s29, %s41
    %s43 = ssub.s32 %s30, %s37
    %s44 = sor.u32 %s42, %s43
    %p45 = scmp.eq.s32.totalorder %s44, 0
    %s47 = sadd.s32 %s46, 1
    %s48 = scalar_select %p45, %s46, %s47
    %p51 = pneg %p45
    %p52 = scmp.eq.s32.totalorder %s22, 1
    %p53 = por %p51, %p52
    %p54 = scmp.ne.s32.totalorder %s46, %s49
    %p55 = scmp.eq.s32.totalorder %s22, 0
    %p56 = por %p54, %p55
    %p57 = scmp.ne.s32.totalorder %s46, %s49
    %p58 = scmp.eq.s32.totalorder %s27, 1
    %p59 = por %p57, %p58
    %p60 = scmp.ne.s32.totalorder %s49, %s50
    %p61 = scmp.eq.s32.totalorder %s27, 0
    %p62 = por %p60, %p61
    %p63 = scmp.ne.s32.totalorder %s49, %s50
    %p64 = scmp.eq.s32.totalorder %s28, 1
    %p65 = por %p63, %p64
    %p67 = scmp.ne.s32.totalorder %s50, %s66
    %p68 = scmp.eq.s32.totalorder %s28, 0
    %p69 = por %p67, %p68
    %s70 = ssub.s32 %s29, %s41
    %p71 = scmp.eq.s32.totalorder %s70, 0
    %s73 = sadd.s32 %s72, 1
    %s74 = scalar_select %p71, %s72, %s73
    %p77 = pneg %p71
    %p78 = scmp.eq.s32.totalorder %s22, 1
    %p79 = por %p77, %p78
    %p80 = scmp.ne.s32.totalorder %s72, %s75
    %p81 = scmp.eq.s32.totalorder %s22, 0
    %p82 = por %p80, %p81
    %p83 = scmp.ne.s32.totalorder %s72, %s75
    %p84 = scmp.eq.s32.totalorder %s27, 1
    %p85 = por %p83, %p84
    %p86 = scmp.ne.s32.totalorder %s75, %s76
    %p87 = scmp.eq.s32.totalorder %s27, 0
    %p88 = por %p86, %p87
    %p89 = scmp.ne.s32.totalorder %s75, %s76
    %p90 = scmp.eq.s32.totalorder %s28, 1
    %p91 = por %p89, %p90
    %p93 = scmp.ne.s32.totalorder %s76, %s92
    %p94 = scmp.eq.s32.totalorder %s28, 0
    %p95 = por %p93, %p94
    %s97 = sadd.s32 %s96, 1
    %p100 = scmp.eq.s32.totalorder %s22, 1
    %p101 = scmp.ne.s32.totalorder %s96, %s98
    %p102 = scmp.eq.s32.totalorder %s22, 0
    %p103 = por %p101, %p102
    %p104 = scmp.ne.s32.totalorder %s96, %s98
    %p105 = scmp.eq.s32.totalorder %s27, 1
    %p106 = por %p104, %p105
    %p107 = scmp.ne.s32.totalorder %s98, %s99
    %p108 = scmp.eq.s32.totalorder %s27, 0
    %p109 = por %p107, %p108
    %p110 = scmp.ne.s32.totalorder %s98, %s99
    %p111 = scmp.eq.s32.totalorder %s28, 1
    %p112 = por %p110, %p111
    %p114 = scmp.ne.s32.totalorder %s99, %s113
    %p115 = scmp.eq.s32.totalorder %s28, 0
    %p116 = por %p114, %p115
    %s118 = sadd.s32 %s117, 1
    %p121 = scmp.eq.s32.totalorder %s22, 1
    %p122 = scmp.ne.s32.totalorder %s117, %s119
    %p123 = scmp.eq.s32.totalorder %s22, 0
    %p124 = por %p122, %p123
    %p125 = scmp.ne.s32.totalorder %s117, %s119
    %p126 = scmp.eq.s32.totalorder %s27, 1
    %p127 = por %p125, %p126
    %p128 = scmp.ne.s32.totalorder %s119, %s120
    %p129 = scmp.eq.s32.totalorder %s27, 0
    %p130 = por %p128, %p129
    %p131 = scmp.ne.s32.totalorder %s119, %s120
    %p132 = scmp.eq.s32.totalorder %s28, 1
    %p133 = por %p131, %p132
    %p135 = scmp.ne.s32.totalorder %s120, %s134
    %p136 = scmp.eq.s32.totalorder %s28, 0
    %p137 = por %p135, %p136
    %s139 = sadd.s32 %s138, 1
    %p142 = scmp.eq.s32.totalorder %s22, 1
    %p143 = scmp.ne.s32.totalorder %s138, %s140
    %p144 = scmp.eq.s32.totalorder %s22, 0
    %p145 = por %p143, %p144
    %p146 = scmp.ne.s32.totalorder %s138, %s140
    %p147 = scmp.eq.s32.totalorder %s27, 1
    %p148 = por %p146, %p147
    %p149 = scmp.ne.s32.totalorder %s140, %s141
    %p150 = scmp.eq.s32.totalorder %s27, 0
    %p151 = por %p149, %p150
    %p152 = scmp.ne.s32.totalorder %s140, %s141
    %p153 = scmp.eq.s32.totalorder %s28, 1
    %p154 = por %p152, %p153
    %p156 = scmp.ne.s32.totalorder %s141, %s155
    %p157 = scmp.eq.s32.totalorder %s28, 0
    %p158 = por %p156, %p157
    %s160 = sadd.s32 %s159, 1
    %p163 = scmp.eq.s32.totalorder %s22, 1
    %p164 = scmp.ne.s32.totalorder %s159, %s161
    %p165 = scmp.eq.s32.totalorder %s22, 0
    %p166 = por %p164, %p165
    %p167 = scmp.ne.s32.totalorder %s159, %s161
    %p168 = scmp.eq.s32.totalorder %s27, 1
    %p169 = por %p167, %p168
    %p170 = scmp.ne.s32.totalorder %s161, %s162
    %p171 = scmp.eq.s32.totalorder %s27, 0
    %p172 = por %p170, %p171
    %p173 = scmp.ne.s32.totalorder %s161, %s162
    %p174 = scmp.eq.s32.totalorder %s28, 1
    %p175 = por %p173, %p174
    %p177 = scmp.ne.s32.totalorder %s162, %s176
    %p178 = scmp.eq.s32.totalorder %s28, 0
    %p179 = por %p177, %p178
    %s181 = sadd.s32 %s180, 1
    %p184 = scmp.eq.s32.totalorder %s22, 1
    %p185 = scmp.ne.s32.totalorder %s180, %s182
    %p186 = scmp.eq.s32.totalorder %s22, 0
    %p187 = por %p185, %p186
    %p188 = scmp.ne.s32.totalorder %s180, %s182
    %p189 = scmp.eq.s32.totalorder %s27, 1
    %p190 = por %p188, %p189
    %p191 = scmp.ne.s32.totalorder %s182, %s183
    %p192 = scmp.eq.s32.totalorder %s27, 0
    %p193 = por %p191, %p192
    %p194 = scmp.ne.s32.totalorder %s182, %s183
    %p195 = scmp.eq.s32.totalorder %s28, 1
    %p196 = por %p194, %p195
    %p198 = scmp.ne.s32.totalorder %s183, %s197
    %p199 = scmp.eq.s32.totalorder %s28, 0
    %p200 = por %p198, %p199
    %s201 = ssub.s32 %s29, %s41
    %s202 = ssub.s32 %s30, %s37
    %s203 = sor.u32 %s201, %s202
    %p204 = scmp.eq.s32.totalorder %s203, 0
    %s206 = sadd.s32 %s205, 1
    %s207 = scalar_select %p204, %s205, %s206
    %p210 = pneg %p204
    %p211 = scmp.eq.s32.totalorder %s22, 1
    %p212 = por %p210, %p211
    %p213 = scmp.ne.s32.totalorder %s205, %s208
    %p214 = scmp.eq.s32.totalorder %s22, 0
    %p215 = por %p213, %p214
    %p216 = scmp.ne.s32.totalorder %s205, %s208
    %p217 = scmp.eq.s32.totalorder %s27, 1
    %p218 = por %p216, %p217
    %p219 = scmp.ne.s32.totalorder %s208, %s209
    %p220 = scmp.eq.s32.totalorder %s27, 0
    %p221 = por %p219, %p220
    %p222 = scmp.ne.s32.totalorder %s208, %s209
    %p223 = scmp.eq.s32.totalorder %s28, 1
    %p224 = por %p222, %p223
    %p226 = scmp.ne.s32.totalorder %s209, %s225
    %p227 = scmp.eq.s32.totalorder %s28, 0
    %p228 = por %p226, %p227
    %p229 = scmp.le.s32.totalorder 1, %s22
    %p230 = scmp.lt.s32.totalorder %s22, 3
    %p231 = pnand %p229, %p230
    %p232 = pneg %p231
    // Predicated region
    $region9: #{matchnet_forward.1} parent=5 // pred_check
      _
    $region10: #{matchnet_forward.1} parent=5 // pred_check_branch
      %234 = sbr.rel (%p231) target = $region12
    $region11: #{matchnet_forward.1} parent=5 // pred_region
      %s235 = ssub.s32 %s22, 1
      // Predicated region
      $region13: #{matchnet_forward.1} parent=11 // pred_check
        %p236 = pneg %p109
      $region14: #{matchnet_forward.1} parent=11 // pred_check_branch
        %238 = sbr.rel (%p236) target = $region16
      $region15: #{matchnet_forward.1} parent=11 // pred_region
        _
      $region16: #{matchnet_forward.1} parent=11 // pred_fallthru
        _
      // Predicated region
      $region17: #{matchnet_forward.1} parent=11 // pred_check
        %p239 = pneg %p130
      $region18: #{matchnet_forward.1} parent=11 // pred_check_branch
        %241 = sbr.rel (%p239) target = $region20
      $region19: #{matchnet_forward.1} parent=11 // pred_region
        _
      $region20: #{matchnet_forward.1} parent=11 // pred_fallthru
        _
      // Predicated region
      $region21: #{matchnet_forward.1} parent=11 // pred_check
        %p242 = pneg %p151
      $region22: #{matchnet_forward.1} parent=11 // pred_check_branch
        %244 = sbr.rel (%p242) target = $region24
      $region23: #{matchnet_forward.1} parent=11 // pred_region
        _
      $region24: #{matchnet_forward.1} parent=11 // pred_fallthru
        _
      // Predicated region
      $region25: #{matchnet_forward.1} parent=11 // pred_check
        %p245 = pneg %p172
      $region26: #{matchnet_forward.1} parent=11 // pred_check_branch
        %247 = sbr.rel (%p245) target = $region28
      $region27: #{matchnet_forward.1} parent=11 // pred_region
        _
      $region28: #{matchnet_forward.1} parent=11 // pred_fallthru
        _
      // Predicated region
      $region29: #{matchnet_forward.1} parent=11 // pred_check
        %p248 = pneg %p193
      $region30: #{matchnet_forward.1} parent=11 // pred_check_branch
        %250 = sbr.rel (%p248) target = $region32
      $region31: #{matchnet_forward.1} parent=11 // pred_region
        _
      $region32: #{matchnet_forward.1} parent=11 // pred_fallthru
        _
    $region12: #{matchnet_forward.1} parent=5 // pred_fallthru
      _
    %p251 = scmp.lt.s32.totalorder %s22, 2
    // Predicated region
    $region33: #{matchnet_forward.1} parent=5 // pred_check
      %p252 = pneg %p251
    $region34: #{matchnet_forward.1} parent=5 // pred_check_branch
      %254 = sbr.rel (%p252) target = $region36
    $region35: #{matchnet_forward.1} parent=5 // pred_region
      // Predicated region
      $region37: #{matchnet_forward.1} parent=35 // pred_check
        %p255 = pneg %p56
      $region38: #{matchnet_forward.1} parent=35 // pred_check_branch
        %257 = sbr.rel (%p255) target = $region40
      $region39: #{matchnet_forward.1} parent=35 // pred_region
        %p258 = scmp.lt.s32.totalorder %s29, 1
        %s259 = scalar_select %p258, %s29, 1
        %p260 = scmp.lt.s32.totalorder %s30, 0
        %s261 = scalar_select %p260, %s30, 0
        %s262 = sadd.s32 %s261, %s259
        %s263 = smul.addr %s262, 4
        %s264 = scalar_lea.vmem %s1, %s263
      $region40: #{matchnet_forward.1} parent=35 // pred_fallthru
        _
      // Predicated region
      $region41: #{matchnet_forward.1} parent=35 // pred_check
        %p265 = pneg %p82
      $region42: #{matchnet_forward.1} parent=35 // pred_check_branch
        %267 = sbr.rel (%p265) target = $region44
      $region43: #{matchnet_forward.1} parent=35 // pred_region
        %p268 = scmp.lt.s32.totalorder %s29, 1
        %s269 = scalar_select %p268, %s29, 1
        %s270 = smul.addr %s269, 4
        %s271 = scalar_lea.vmem %s2, %s270
      $region44: #{matchnet_forward.1} parent=35 // pred_fallthru
        _
    $region36: #{matchnet_forward.1} parent=5 // pred_fallthru
      _
    %p272 = scmp.le.s32.totalorder 1, %s22
    %p273 = scmp.lt.s32.totalorder %s22, 3
    %p274 = pnand %p272, %p273
    %p275 = pneg %p274
    // Predicated region
    $region45: #{matchnet_forward.1} parent=5 // pred_check
      _
    $region46: #{matchnet_forward.1} parent=5 // pred_check_branch
      %277 = sbr.rel (%p274) target = $region48
    $region47: #{matchnet_forward.1} parent=5 // pred_region
      %s278 = ssub.s32 %s22, 1
      %p279 = scmp.lt.s32.totalorder %s31, 1
      %s280 = scalar_select %p279, %s31, 1
      %p281 = scmp.lt.s32.totalorder %s32, 0
      %s282 = scalar_select %p281, %s32, 0
      %s283 = sadd.s32 %s282, %s280
      %s284 = smul.addr %s283, 4
      %s285 = scalar_lea.vmem %s1, %s284
      %p286 = pneg %p62
      %p287 = pneg %p59
      %p288 = scmp.lt.s32.totalorder %s31, 1
      %s289 = scalar_select %p288, %s31, 1
      %s290 = smul.addr %s289, 4
      %s291 = scalar_lea.vmem %s2, %s290
      %p292 = pneg %p88
      %p293 = pneg %p85
      %p294 = pneg %p109
      %p295 = pneg %p106
      %p296 = pneg %p130
      %p297 = pneg %p127
      %p298 = pneg %p151
      %p299 = pneg %p148
      %p300 = pneg %p172
      %p301 = pneg %p169
      %p302 = pneg %p193
      %p303 = pneg %p190
      %p304 = pneg %p221
      %p305 = pneg %p218
      %p306 = scmp.lt.s32.totalorder %s31, 1
      %s307 = scalar_select %p306, %s31, 1
      %p308 = scmp.lt.s32.totalorder %s32, 0
      %s309 = scalar_select %p308, %s32, 0
      %s310 = smul.addr %s309, 2
      %s311 = smul.addr %s307, 2
      %s312 = sadd.s32 %s310, %s311
      %s313 = smul.addr %s312, 4
      %s314 = scalar_lea.vmem %s8, %s313
      %p315 = scmp.lt.s32.totalorder %s31, 1
      %s316 = scalar_select %p315, %s31, 1
      %p317 = scmp.lt.s32.totalorder %s32, 0
      %s318 = scalar_select %p317, %s32, 0
      %s319 = sadd.s32 %s318, %s316
      %s320 = smul.addr %s319, 4
      %s321 = scalar_lea.vmem %s1, %s320
      %p322 = scmp.lt.s32.totalorder %s31, 1
      %s323 = scalar_select %p322, %s31, 1
      %s324 = smul.addr %s323, 4
      %s325 = scalar_lea.vmem %s2, %s324
      %p326 = scmp.lt.s32.totalorder %s31, 1
      %s327 = scalar_select %p326, %s31, 1
      %p328 = scmp.lt.s32.totalorder %s32, 0
      %s329 = scalar_select %p328, %s32, 0
      %s330 = smul.addr %s329, 2
      %s331 = smul.addr %s327, 2
      %s332 = sadd.s32 %s330, %s331
      %s333 = smul.addr %s332, 4
      %s334 = scalar_lea.vmem %s8, %s333
      %p336 = scmp.eq.s32.totalorder %s32, 0
      // Predicated region
      $region49: #{matchnet_forward.1} parent=47 // pred_check
        %p337 = pneg %p336
      $region50: #{matchnet_forward.1} parent=47 // pred_check_branch
        %339 = sbr.rel (%p337) target = $region52
      $region51: #{matchnet_forward.1} parent=47 // pred_region
        %v340 = vld [vmem:[%s325] sm:$0xf]
        %v341 = vld [vmem:[%s3] sm:$0xf]
        %v342 = vld [vmem:[%s3 + $0x4] sm:$0xf]
        %v343 = vld [vmem:[%s3 + $0x8] sm:$0xf]
        %v344 = vld [vmem:[%s3 + $0xc] sm:$0xf]
        %v345 = vld [vmem:[%s3 + $0x10] sm:$0xf]
        %v346 = vld [vmem:[%s3 + $0x14] sm:$0xf]
        %v347 = vld [vmem:[%s3 + $0x18] sm:$0xf]
        %v348 = vld [vmem:[%s3 + $0x1c] sm:$0xf]
        %v349 = vld [vmem:[%s3 + $0x20] sm:$0xf]
        %v350 = vld [vmem:[%s3 + $0x24] sm:$0xf]
        %v351 = vld [vmem:[%s3 + $0x28] sm:$0xf]
        %v352 = vld [vmem:[%s3 + $0x2c] sm:$0xf]
        %v353 = vld [vmem:[%s3 + $0x30] sm:$0xf]
        %v354 = vld [vmem:[%s3 + $0x34] sm:$0xf]
        %v355 = vld [vmem:[%s3 + $0x38] sm:$0xf]
        %v356 = vld [vmem:[%s3 + $0x3c] sm:$0xf]
        %v357 = vld [vmem:[%s4] sm:$0x1]
        %v359 = vperm.slane %v357, 0
        %v377 = vunpack.c.l.b16 %v341
        %v378 = vunpack.c.l.b16 %v342
        %v379 = vunpack.c.l.b16 %v343
        %v380 = vunpack.c.l.b16 %v344
        %v381 = vunpack.c.l.b16 %v345
        %v382 = vunpack.c.l.b16 %v346
        %v383 = vunpack.c.l.b16 %v347
        %v384 = vunpack.c.l.b16 %v348
        %v385 = vunpack.c.l.b16 %v349
        %v386 = vunpack.c.l.b16 %v350
        %v387 = vunpack.c.l.b16 %v351
        %v388 = vunpack.c.l.b16 %v352
        %v389 = vunpack.c.l.b16 %v353
        %v390 = vunpack.c.l.b16 %v354
        %v391 = vunpack.c.l.b16 %v355
        %v392 = vunpack.c.l.b16 %v356
        %v393 = vpack.c.b16 %v378, %v377
        %v394 = vpack.c.b16 %v380, %v379
        %v395 = vpack.c.b16 %v382, %v381
        %v396 = vpack.c.b16 %v384, %v383
        %v397 = vpack.c.b16 %v386, %v385
        %v398 = vpack.c.b16 %v388, %v387
        %v399 = vpack.c.b16 %v390, %v389
        %v400 = vpack.c.b16 %v392, %v391
        %409 = vmatpush.bf16.msra.mxu0 %v400
        %410 = vmatpush.bf16.msra.mxu0 %v399
        %411 = vmatpush.bf16.msra.mxu0 %v398
        %412 = vmatpush.bf16.msra.mxu0 %v397
        %413 = vmatpush.bf16.msra.mxu0 %v396
        %414 = vmatpush.bf16.msra.mxu0 %v395
        %415 = vmatpush.bf16.msra.mxu0 %v394
        %416 = vmatpush.bf16.msra.mxu0 %v393
        %417 = vmatmul.bf16.gmra.mxu0 %v340
        %v418 = vpop.f32.mrf.mxu0
        %v419 = vadd.f32 %v359, %v418
        %v420 = vpop.f32.mrf.mxu0
        %421 = vdwg.mxu0
        %v422 = vpack.c.bf16 %v419, %v419
        %423 = vst [vmem:[#allocation2] sm:$0xf] %v422
      $region52: #{matchnet_forward.1} parent=47 // pred_fallthru
        _
      %v424 = vld [vmem:[%s321] sm:$0xf]
      %v425 = vld [vmem:[%s325] sm:$0xf]
      %v426 = vld [vmem:[#allocation2] sm:$0xf]
      %427 = vmatpush.bf16.xpose.msra.mxu0 0
      %428 = vmatpush.bf16.xpose.msra.mxu0 0
      %429 = vmatpush.bf16.xpose.msra.mxu0 0
      %430 = vmatpush.bf16.xpose.msra.mxu0 0
      %431 = vmatpush.bf16.xpose.msra.mxu0 0
      %432 = vmatpush.bf16.xpose.msra.mxu0 0
      %433 = vmatpush.bf16.xpose.msra.mxu0 0
      %434 = vmatpush.bf16.xpose.msra.mxu0 %v426
      %435 = vmatmul.bf16.gmra.mxu0 %v424
      %v436 = vpop.f32.mrf.mxu0
      %v437 = vadd.f32 0.0, %v436
      %v438 = vpop.f32.mrf.mxu0
      %439 = vdwg.mxu0
      %s440 = sld [smem:[#allocation4 + %s31]]
      %v441 = vstv %s440
      %v442 = vlaneseq
      %v443 = vand.u32 %v442, 127
      %vm444 = vcmp.lt.s32.totalorder %v443, %v441
      %v445 = vsel %vm444, %v437, 0.0
      %vm446 = vcmask 64512
      %v447 = vsel %vm446, %v445, -inf
      %448 = vmax.xlane.f32.xlu0 %v447
      %v449 = vpop.xlane.xlu0 %448
      %v450 = vsub.f32 %v445, %v449
      %v451 = vmul.f32 %v450, 1.442695
      %v452 = vpow.pop %v451
      %v453 = vsel %vm446, %v452, 0.0
      %454 = vadd.xlane.f32.xlu0 %v453
      %v455 = vpop.xlane.xlu0 %454
      %v456 = vsel %vm444, %v452, 0.0
      %v457 = vsel %vm446, %v456, 0.0
      %458 = vadd.xlane.f32.xlu0 %v457
      %v459 = vpop.xlane.xlu0 %458
      %v460 = vmul.f32 %v455, 1e-13
      %v461 = vadd.f32 %v459, %v460
      %v462 = vrcp.pop %v461
      %v463 = vmul.f32 %v456, %v462
      %v464 = vpack.c.bf16 %v463, %v463
      %v466 = vsel %vm446, %v464, 0
      %vm468 = vcmask 1043456
      %v470 = vsel %vm468, %v425, 0
      %472 = vmatpush.bf16.msra.mxu0 0
      %473 = vmatpush.bf16.msra.mxu0 0
      %474 = vmatpush.bf16.msra.mxu0 0
      %475 = vmatpush.bf16.msra.mxu0 0
      %476 = vmatpush.bf16.msra.mxu0 0
      %477 = vmatpush.bf16.msra.mxu0 0
      %478 = vmatpush.bf16.msra.mxu0 0
      %479 = vmatpush.bf16.msra.mxu0 %v470
      %480 = vmatmul.bf16.gmra.mxu0 %v466
      %v481 = vpop.f32.mrf.mxu0
      %v482 = vadd.f32 0.0, %v481
      %v483 = vpop.f32.mrf.mxu0
      %484 = vdwg.mxu0
      %v485 = vunpack.c.l.bf16 %v424
      %v486 = vsub.f32 %v482, %v485
      %v487 = vmul.f32 %v482, %v485
      %v488 = vpack.c.bf16 %v486, %v486
      %v489 = vpack.c.bf16 %v487, %v487
      %v490 = vld [vmem:[%s5] sm:$0xff]
      %v491 = vld [vmem:[%s5 + $0x8] sm:$0xff]
      %v492 = vld [vmem:[%s5 + $0x10] sm:$0xff]
      %v493 = vld [vmem:[%s5 + $0x18] sm:$0xff]
      %v494 = vld [vmem:[%s5 + $0x20] sm:$0xff]
      %v495 = vld [vmem:[%s5 + $0x28] sm:$0xff]
      %v496 = vld [vmem:[%s5 + $0x30] sm:$0xff]
      %v497 = vld [vmem:[%s5 + $0x38] sm:$0xff]
      %v498 = vld [vmem:[%s5 + $0x40] sm:$0xff]
      %v499 = vld [vmem:[%s5 + $0x48] sm:$0xff]
      %v500 = vld [vmem:[%s5 + $0x50] sm:$0xff]
      %v501 = vld [vmem:[%s5 + $0x58] sm:$0xff]
      %v502 = vld [vmem:[%s5 + $0x60] sm:$0xff]
      %v503 = vld [vmem:[%s5 + $0x68] sm:$0xff]
      %v504 = vld [vmem:[%s5 + $0x70] sm:$0xff]
      %v505 = vld [vmem:[%s5 + $0x78] sm:$0xff]
      %v506 = vld [vmem:[%s6] sm:$0xff]
      %v507 = vld [vmem:[%s6 + $0x8] sm:$0xff]
      %v508 = vld [vmem:[%s6 + $0x10] sm:$0xff]
      %v509 = vld [vmem:[%s6 + $0x18] sm:$0xff]
      %v510 = vld [vmem:[%s6 + $0x20] sm:$0xff]
      %v511 = vld [vmem:[%s6 + $0x28] sm:$0xff]
      %v512 = vld [vmem:[%s6 + $0x30] sm:$0xff]
      %v513 = vld [vmem:[%s6 + $0x38] sm:$0xff]
      %v514 = vld [vmem:[%s6 + $0x40] sm:$0xff]
      %v515 = vld [vmem:[%s6 + $0x48] sm:$0xff]
      %v516 = vld [vmem:[%s6 + $0x50] sm:$0xff]
      %v517 = vld [vmem:[%s6 + $0x58] sm:$0xff]
      %v518 = vld [vmem:[%s6 + $0x60] sm:$0xff]
      %v519 = vld [vmem:[%s6 + $0x68] sm:$0xff]
      %v520 = vld [vmem:[%s6 + $0x70] sm:$0xff]
      %v521 = vld [vmem:[%s6 + $0x78] sm:$0xff]
      %v538 = vunpack.c.l.b16 %v506
      %v539 = vunpack.c.h.b16 %v506
      %v540 = vunpack.c.l.b16 %v507
      %v541 = vunpack.c.h.b16 %v507
      %v542 = vunpack.c.l.b16 %v508
      %v543 = vunpack.c.h.b16 %v508
      %v544 = vunpack.c.l.b16 %v509
      %v545 = vunpack.c.h.b16 %v509
      %v546 = vunpack.c.l.b16 %v510
      %v547 = vunpack.c.h.b16 %v510
      %v548 = vunpack.c.l.b16 %v511
      %v549 = vunpack.c.h.b16 %v511
      %v550 = vunpack.c.l.b16 %v512
      %v551 = vunpack.c.h.b16 %v512
      %v552 = vunpack.c.l.b16 %v513
      %v553 = vunpack.c.h.b16 %v513
      %v554 = vunpack.c.l.b16 %v514
      %v555 = vunpack.c.h.b16 %v514
      %v556 = vunpack.c.l.b16 %v515
      %v557 = vunpack.c.h.b16 %v515
      %v558 = vunpack.c.l.b16 %v516
      %v559 = vunpack.c.h.b16 %v516
      %v560 = vunpack.c.l.b16 %v517
      %v561 = vunpack.c.h.b16 %v517
      %v562 = vunpack.c.l.b16 %v518
      %v563 = vunpack.c.h.b16 %v518
      %v564 = vunpack.c.l.b16 %v519
      %v565 = vunpack.c.h.b16 %v519
      %v566 = vunpack.c.l.b16 %v520
      %v567 = vunpack.c.h.b16 %v520
      %v568 = vunpack.c.l.b16 %v521
      %v569 = vunpack.c.h.b16 %v521
      %v570 = vpack.c.b16 %v540, %v538
      %v571 = vpack.c.b16 %v541, %v539
      %v572 = vpack.c.b16 %v544, %v542
      %v573 = vpack.c.b16 %v545, %v543
      %v574 = vpack.c.b16 %v548, %v546
      %v575 = vpack.c.b16 %v549, %v547
      %v576 = vpack.c.b16 %v552, %v550
      %v577 = vpack.c.b16 %v553, %v551
      %v578 = vpack.c.b16 %v556, %v554
      %v579 = vpack.c.b16 %v557, %v555
      %v580 = vpack.c.b16 %v560, %v558
      %v581 = vpack.c.b16 %v561, %v559
      %v582 = vpack.c.b16 %v564, %v562
      %v583 = vpack.c.b16 %v565, %v563
      %v584 = vpack.c.b16 %v568, %v566
      %v585 = vpack.c.b16 %v569, %v567
      %602 = vmatpush.bf16.msra.mxu0 %v584
      %603 = vmatpush.bf16.msra.mxu0 %v582
      %604 = vmatpush.bf16.msra.mxu0 %v580
      %605 = vmatpush.bf16.msra.mxu0 %v578
      %606 = vmatpush.bf16.msra.mxu0 %v576
      %607 = vmatpush.bf16.msra.mxu0 %v574
      %608 = vmatpush.bf16.msra.mxu0 %v572
      %609 = vmatpush.bf16.msra.mxu0 %v570
      %610 = vmatmul.bf16.gmra.mxu0 %v489
      %v611 = vpop.f32.mrf.mxu0
      %v612 = vadd.f32 0.0, %v611
      %v613 = vpop.f32.mrf.mxu0
      %614 = vdwg.mxu0
      %615 = vmatpush.bf16.msra.mxu0 %v585
      %616 = vmatpush.bf16.msra.mxu0 %v583
      %617 = vmatpush.bf16.msra.mxu0 %v581
      %618 = vmatpush.bf16.msra.mxu0 %v579
      %619 = vmatpush.bf16.msra.mxu0 %v577
      %620 = vmatpush.bf16.msra.mxu0 %v575
      %621 = vmatpush.bf16.msra.mxu0 %v573
      %622 = vmatpush.bf16.msra.mxu0 %v571
      %623 = vmatmul.bf16.gmra.mxu0 %v489
      %v624 = vpop.f32.mrf.mxu0
      %v625 = vadd.f32 0.0, %v624
      %v626 = vpop.f32.mrf.mxu0
      %627 = vdwg.mxu0
      %v644 = vunpack.c.l.b16 %v490
      %v645 = vunpack.c.h.b16 %v490
      %v646 = vunpack.c.l.b16 %v491
      %v647 = vunpack.c.h.b16 %v491
      %v648 = vunpack.c.l.b16 %v492
      %v649 = vunpack.c.h.b16 %v492
      %v650 = vunpack.c.l.b16 %v493
      %v651 = vunpack.c.h.b16 %v493
      %v652 = vunpack.c.l.b16 %v494
      %v653 = vunpack.c.h.b16 %v494
      %v654 = vunpack.c.l.b16 %v495
      %v655 = vunpack.c.h.b16 %v495
      %v656 = vunpack.c.l.b16 %v496
      %v657 = vunpack.c.h.b16 %v496
      %v658 = vunpack.c.l.b16 %v497
      %v659 = vunpack.c.h.b16 %v497
      %v660 = vunpack.c.l.b16 %v498
      %v661 = vunpack.c.h.b16 %v498
      %v662 = vunpack.c.l.b16 %v499
      %v663 = vunpack.c.h.b16 %v499
      %v664 = vunpack.c.l.b16 %v500
      %v665 = vunpack.c.h.b16 %v500
      %v666 = vunpack.c.l.b16 %v501
      %v667 = vunpack.c.h.b16 %v501
      %v668 = vunpack.c.l.b16 %v502
      %v669 = vunpack.c.h.b16 %v502
      %v670 = vunpack.c.l.b16 %v503
      %v671 = vunpack.c.h.b16 %v503
      %v672 = vunpack.c.l.b16 %v504
      %v673 = vunpack.c.h.b16 %v504
      %v674 = vunpack.c.l.b16 %v505
      %v675 = vunpack.c.h.b16 %v505
      %v676 = vpack.c.b16 %v646, %v644
      %v677 = vpack.c.b16 %v647, %v645
      %v678 = vpack.c.b16 %v650, %v648
      %v679 = vpack.c.b16 %v651, %v649
      %v680 = vpack.c.b16 %v654, %v652
      %v681 = vpack.c.b16 %v655, %v653
      %v682 = vpack.c.b16 %v658, %v656
      %v683 = vpack.c.b16 %v659, %v657
      %v684 = vpack.c.b16 %v662, %v660
      %v685 = vpack.c.b16 %v663, %v661
      %v686 = vpack.c.b16 %v666, %v664
      %v687 = vpack.c.b16 %v667, %v665
      %v688 = vpack.c.b16 %v670, %v668
      %v689 = vpack.c.b16 %v671, %v669
      %v690 = vpack.c.b16 %v674, %v672
      %v691 = vpack.c.b16 %v675, %v673
      %708 = vmatpush.bf16.msra.mxu0 %v690
      %709 = vmatpush.bf16.msra.mxu0 %v688
      %710 = vmatpush.bf16.msra.mxu0 %v686
      %711 = vmatpush.bf16.msra.mxu0 %v684
      %712 = vmatpush.bf16.msra.mxu0 %v682
      %713 = vmatpush.bf16.msra.mxu0 %v680
      %714 = vmatpush.bf16.msra.mxu0 %v678
      %715 = vmatpush.bf16.msra.mxu0 %v676
      %716 = vmatmul.bf16.gmra.mxu0 %v488
      %v717 = vpop.f32.mrf.mxu0
      %v718 = vadd.f32 %v612, %v717
      %v719 = vpop.f32.mrf.mxu0
      %720 = vdwg.mxu0
      %721 = vmatpush.bf16.msra.mxu0 %v691
      %722 = vmatpush.bf16.msra.mxu0 %v689
      %723 = vmatpush.bf16.msra.mxu0 %v687
      %724 = vmatpush.bf16.msra.mxu0 %v685
      %725 = vmatpush.bf16.msra.mxu0 %v683
      %726 = vmatpush.bf16.msra.mxu0 %v681
      %727 = vmatpush.bf16.msra.mxu0 %v679
      %728 = vmatpush.bf16.msra.mxu0 %v677
      %729 = vmatmul.bf16.gmra.mxu0 %v488
      %v730 = vpop.f32.mrf.mxu0
      %v731 = vadd.f32 %v625, %v730
      %v732 = vpop.f32.mrf.mxu0
      %733 = vdwg.mxu0
      %v734 = vld [vmem:[%s7] sm:$0x3]
      %v736 = vperm.slane %v734, 0
      %v737 = vperm.slane %v734, 1
      %v740 = vadd.f32 %v718, %v736
      %v741 = vadd.f32 %v731, %v737
      %v742 = vmax.f32 %v740, 0.0
      %v743 = vmax.f32 %v741, 0.0
      %v744 = vpack.c.bf16 %v743, %v742
      %745 = vst [vmem:[%s334] sm:$0xff] %v744
      %p746 = scmp.lt.s32.totalorder %s31, 1
      %s747 = scalar_select %p746, %s31, 1
      %p748 = scmp.lt.s32.totalorder %s32, 0
      %s749 = scalar_select %p748, %s32, 0
      %s750 = smul.addr %s749, 2
      %s751 = smul.addr %s747, 2
      %s752 = sadd.s32 %s750, %s751
      %s753 = smul.addr %s752, 4
      %s754 = scalar_lea.vmem %s8, %s753
      // Predicated region
      $region53: #{matchnet_forward.1} parent=47 // pred_check
        %p755 = pneg %p218
      $region54: #{matchnet_forward.1} parent=47 // pred_check_branch
        %757 = sbr.rel (%p755) target = $region56
      $region55: #{matchnet_forward.1} parent=47 // pred_region
        _
      $region56: #{matchnet_forward.1} parent=47 // pred_fallthru
        _
    $region48: #{matchnet_forward.1} parent=5 // pred_fallthru
      _
    %p758 = scmp.le.s32.totalorder 2, %s22
    // Predicated region
    $region57: #{matchnet_forward.1} parent=5 // pred_check
      %p759 = pneg %p758
    $region58: #{matchnet_forward.1} parent=5 // pred_check_branch
      %761 = sbr.rel (%p759) target = $region60
    $region59: #{matchnet_forward.1} parent=5 // pred_region
      %s762 = ssub.s32 %s22, 2
      // Predicated region
      $region61: #{matchnet_forward.1} parent=59 // pred_check
        %p763 = pneg %p224
      $region62: #{matchnet_forward.1} parent=59 // pred_check_branch
        %765 = sbr.rel (%p763) target = $region64
      $region63: #{matchnet_forward.1} parent=59 // pred_region
        %p766 = scmp.lt.s32.totalorder %s33, 1
        %s767 = scalar_select %p766, %s33, 1
        %p768 = scmp.lt.s32.totalorder %s34, 0
        %s769 = scalar_select %p768, %s34, 0
        %s770 = smul.addr %s769, 2
        %s771 = smul.addr %s767, 2
        %s772 = sadd.s32 %s770, %s771
        %s773 = smul.addr %s772, 4
        %s774 = scalar_lea.vmem %s8, %s773
      $region64: #{matchnet_forward.1} parent=59 // pred_fallthru
        _
    $region60: #{matchnet_forward.1} parent=5 // pred_fallthru
      _
  $region6: #{matchnet_forward.1} parent=0 // loop_footer
    %s26 = sadd.s32 1, %s22
  $region7: #{matchnet_forward.1} parent=0 // loop_footer_branch
    %21 = sbr.rel target = $region3
  $region8: #{matchnet_forward.1} parent=0 // loop_exit
    _

</llo_original>
